<compile_context>
chip_gen: v5e
topology: v5e:2x2
jax: 0.10.0
libtpu: 0.0.40
codegen_flags: <defaults>
</compile_context>

<pallas_src>
import jax
import jax.numpy as jnp
from jax import lax
from jax.experimental import pallas as pl
from jax.experimental.pallas import tpu as pltpu


# ----------------------------------------------------------------------------
# Fused Pallas kernel: GRU over time + dueling Q head
# ----------------------------------------------------------------------------
def qnet_kernel(x_ref, y_ref,
                wih_ref, whh_ref, bgi_ref, bhn_ref,
                w1_ref, b1_ref,
                w2v_ref, b2v_ref, wov_ref, bov_ref,
                wax_ref, way_ref, ba_ref, woa_ref, boa_ref,
                q_ref,
                gir_ref, giz_ref, gin_ref, h_ref):
    L, nb, D = x_ref.shape              # x is time-major: [L, bn, D] (bf16)
    H = whh_ref.shape[-1]
    Hh = w1_ref.shape[-1]
    _, K, E = y_ref.shape
    f32 = jnp.float32

    # ---- hoisted input projection: one [L*bn, D] x [D, H] matmul per gate ----
    # (biases for r/z already include b_hh; n keeps only b_ih)
    x2d = x_ref[...].reshape(L * nb, D)                      # layout-preserving merge
    for g, gi_ref in enumerate((gir_ref, giz_ref, gin_ref)):
        gi_ref[...] = (jnp.dot(x2d, wih_ref[g], preferred_element_type=f32)
                       + bgi_ref[g]).reshape(L, nb, H)

    # ---- serial GRU recurrence (PyTorch gate order r, z, n) -----------------
    # All loop-carried state (gi slabs, h) is ref-backed in VMEM scratch, so the
    # static unroll keeps only one step's temporaries live (same code as
    # lax.fori_loop(unroll=True) but with static slice offsets).
    h_ref[...] = jnp.zeros_like(h_ref)
    for t in range(L):
        h = h_ref[...]                                       # [bn, H] f32
        hb = h.astype(jnp.bfloat16)
        gh_r = jnp.dot(hb, whh_ref[0], preferred_element_type=f32)
        gh_z = jnp.dot(hb, whh_ref[1], preferred_element_type=f32)
        gh_n = jnp.dot(hb, whh_ref[2], preferred_element_type=f32) + bhn_ref[...]
        r = jax.nn.sigmoid(gir_ref[t] + gh_r)
        z = jax.nn.sigmoid(giz_ref[t] + gh_z)
        c = jnp.tanh(gin_ref[t] + r * gh_n)
        h_ref[...] = (1.0 - z) * c + z * h

    # ---- dueling head on the final hidden state (fused, stays in VMEM) ------
    h = h_ref[...]
    x1 = jnp.maximum(jnp.dot(h.astype(jnp.bfloat16), w1_ref[...],
                             preferred_element_type=f32) + b1_ref[...], 0.0)
    x1b = x1.astype(jnp.bfloat16)

    # value stream: Hh -> 1 as a VPU multiply + lane reduction (no 1-col matmul)
    v_hid = jnp.maximum(jnp.dot(x1b, w2v_ref[...], preferred_element_type=f32)
                        + b2v_ref[...], 0.0)
    value = jnp.sum(v_hid * wov_ref[...], axis=-1, keepdims=True) + bov_ref[...]   # [bn,1]

    # advantage stream: cat((x1 repeated K times, y)) @ W_adv split into the
    # x-part (shared over K) and the y-part -> no repeat/concat.
    a_x = jnp.dot(x1b, wax_ref[...], preferred_element_type=f32)                   # [bn,Hh]
    a_y = jnp.dot(y_ref[...].reshape(nb * K, E), way_ref[...],
                  preferred_element_type=f32).reshape(nb, K, Hh)                   # [bn,K,Hh]
    a_hid = jnp.maximum(a_x[:, None, :] + a_y + ba_ref[...], 0.0)                  # [bn,K,Hh]
    adv = jnp.sum(a_hid * woa_ref[...][None, :, :], axis=-1) + boa_ref[...]        # [bn,K]

    q_ref[...] = adv + value - jnp.mean(adv, axis=1, keepdims=True)


# ----------------------------------------------------------------------------
# Wrapper
# ----------------------------------------------------------------------------
def qnet_forward(params, x, y):
    """x: [N, L, D] history (batch-major), y: [N, K, E] candidate embeddings -> Q [N, K]."""
    N, L, D = x.shape
    _, K, E = y.shape
    H = params["w_hh"].shape[-1]        # state_dim
    Hh = params["w1_T"].shape[-1]       # hidden_dim

    def ceil_to(v, m):
        return ((v + m - 1) // m) * m

    # ---- batch tile: big MXU-friendly tiles; >=2 tiles once N>8 (v7x megacore) ----
    if N <= 8:
        bn = ceil_to(max(N, 1), 8)
    else:
        bn = min(128, ceil_to(pl.cdiv(N, 2), 16))

    # ---- shrink bn so the tile fits a conservative VMEM budget (v7x: 64 MiB phys) ----
    w_bytes = 2 * (3 * D * H + 3 * H * H + H * Hh + 2 * Hh * Hh + E * Hh)   # bf16 weights

    def vmem_bytes(b):
        blocks = 2 * (L * b * D * 2 + b * K * E * 2 + b * K * 4)            # double-buffered blocks
        scratch = (3 * L * b * H + b * H) * 4                               # gi slabs + h (f32)
        return 2 * w_bytes + blocks + scratch                               # weights double-buffered

    while bn > 16 and vmem_bytes(bn) > 48 * 1024 * 1024:
        bn -= 16

    Np = ceil_to(N, bn)
    grid = (Np // bn,)

    # ---- layout prep: time-major x (per-step gi slices become leading-axis), pad batch ----
    xt = jnp.transpose(x, (1, 0, 2))                       # [L, N, D]
    if Np != N:
        xt = jnp.pad(xt, ((0, 0), (0, Np - N), (0, 0)))
        y = jnp.pad(y, ((0, Np - N), (0, 0), (0, 0)))
    xt = xt.astype(jnp.bfloat16)
    yb = y.astype(jnp.bfloat16)

    # bf16 MXU operands (f32 accumulation inside kernel); biases / reduce-rows stay f32.
    bf = jnp.bfloat16
    wih, whh = params["w_ih"].astype(bf), params["w_hh"].astype(bf)
    w1, w2v = params["w1_T"].astype(bf), params["w2v_T"].astype(bf)
    wax, way = params["wax_T"].astype(bf), params["way_T"].astype(bf)
    # Fold b_hh[r], b_hh[z] into the hoisted input projection; keep b_hh[n] separate
    # (it sits inside r * (W_hn h + b_hn)).
    b_gi = jnp.concatenate([params["b_ih"][:2] + params["b_hh"][:2],
                            params["b_ih"][2:3]], axis=0)                   # [3,1,H] f32
    b_hn = params["b_hh"][2]                                                # [1,H]   f32

    def full(shape):
        zeros = (0,) * len(shape)
        return pl.BlockSpec(shape, lambda b: zeros)

    in_specs = [
        pl.BlockSpec((L, bn, D), lambda b: (0, b, 0)),   # x (time-major)
        pl.BlockSpec((bn, K, E), lambda b: (b, 0, 0)),   # y
        full((3, D, H)),     # w_ih per gate (bf16)
        full((3, H, H)),     # w_hh per gate (bf16)
        full((3, 1, H)),     # folded input-side gate biases (f32)
        full((1, H)),        # b_hh[n] (f32)
        full((H, Hh)), full((1, Hh)),                    # fc1
        full((Hh, Hh)), full((1, Hh)),                   # fc2_value
        full((1, Hh)), full((1, 1)),                     # out_value (row) + bias
        full((Hh, Hh)), full((E, Hh)), full((1, Hh)),    # fc2_advantage split x/y + bias
        full((1, Hh)), full((1, 1)),                     # out_advantage (row) + bias
    ]

    q = pl.pallas_call(
        qnet_kernel,
        out_shape=jax.ShapeDtypeStruct((Np, K), jnp.float32),
        grid_spec=pltpu.PrefetchScalarGridSpec(
            num_scalar_prefetch=0,
            grid=grid,
            in_specs=in_specs,
            out_specs=pl.BlockSpec((bn, K), lambda b: (b, 0)),
            scratch_shapes=[pltpu.VMEM((L, bn, H), jnp.float32),   # gi_r
                            pltpu.VMEM((L, bn, H), jnp.float32),   # gi_z
                            pltpu.VMEM((L, bn, H), jnp.float32),   # gi_n
                            pltpu.VMEM((bn, H), jnp.float32)],     # h
        ),
        compiler_params=pltpu.CompilerParams(
            dimension_semantics=("parallel",),
            vmem_limit_bytes=64 * 1024 * 1024,
        ),
    )(xt, yb, wih, whh, b_gi, b_hn,
      w1, params["b1"], w2v, params["b2v"], params["wov_row"], params["bov"],
      wax, way, params["ba"], params["woa_row"], params["boa"])
    return q[:N]


# ----------------------------------------------------------------------------
# Pure-JAX reference (mirrors the PyTorch forward; lengths_x=None, choose_action=True)
# ----------------------------------------------------------------------------
def qnet_reference(params, x, y):
    N, L, D = x.shape
    H = params["w_hh"].shape[-1]
    hi = lax.Precision.HIGHEST
    wih, whh = params["w_ih"], params["w_hh"]
    bih, bhh = params["b_ih"], params["b_hh"]

    def mm(a, b):
        return jnp.dot(a, b, precision=hi)

    def step(h, x_t):
        r = jax.nn.sigmoid(mm(x_t, wih[0]) + bih[0] + mm(h, whh[0]) + bhh[0])
        z = jax.nn.sigmoid(mm(x_t, wih[1]) + bih[1] + mm(h, whh[1]) + bhh[1])
        n = jnp.tanh(mm(x_t, wih[2]) + bih[2] + r * (mm(h, whh[2]) + bhh[2]))
        return (1.0 - z) * n + z * h, None

    h0 = jnp.zeros((N, H), jnp.float32)
    hT, _ = lax.scan(step, h0, jnp.transpose(x, (1, 0, 2)))

    x1 = jax.nn.relu(mm(hT, params["w1_T"]) + params["b1"])
    v_hid = jax.nn.relu(mm(x1, params["w2v_T"]) + params["b2v"])
    value = jnp.sum(v_hid * params["wov_row"], axis=-1, keepdims=True) + params["bov"]   # [N,1]
    a_x = mm(x1, params["wax_T"])                                                        # [N,Hh]
    a_y = jnp.einsum("nke,eh->nkh", y, params["way_T"], precision=hi)                    # [N,K,Hh]
    a_hid = jax.nn.relu(a_x[:, None, :] + a_y + params["ba"])
    adv = jnp.sum(a_hid * params["woa_row"][None, :, :], axis=-1) + params["boa"]        # [N,K]
    return adv + value - jnp.mean(adv, axis=1, keepdims=True)


def init_params(key, x_dim, state_dim, hidden_dim, emb_size):
    """Deterministic PyTorch-style uniform(-1/sqrt(fan), 1/sqrt(fan)) init."""
    ks = jax.random.split(key, 16)

    def u(k, shape, fan):
        bound = 1.0 / jnp.sqrt(jnp.float32(fan))
        return jax.random.uniform(k, shape, jnp.float32, -bound, bound)

    H, Hh, E = state_dim, hidden_dim, emb_size
    p = {}
    # GRU, per-gate slabs (gate order r, z, n), weights pre-transposed to (in, H)
    p["w_ih"] = u(ks[0], (3, x_dim, H), H)
    p["w_hh"] = u(ks[1], (3, H, H), H)
    p["b_ih"] = u(ks[2], (3, 1, H), H)
    p["b_hh"] = u(ks[3], (3, 1, H), H)
    # fc1
    p["w1_T"] = u(ks[4], (H, Hh), H)
    p["b1"] = u(ks[5], (1, Hh), H)
    # value stream
    p["w2v_T"] = u(ks[6], (Hh, Hh), Hh)
    p["b2v"] = u(ks[7], (1, Hh), Hh)
    p["wov_row"] = u(ks[8], (1, Hh), Hh)
    p["bov"] = u(ks[9], (1, 1), Hh)
    # advantage stream: fc2_advantage weight [Hh, Hh+E] split into x-part / y-part
    p["wax_T"] = u(ks[10], (Hh, Hh), Hh + E)
    p["way_T"] = u(ks[11], (E, Hh), Hh + E)
    p["ba"] = u(ks[12], (1, Hh), Hh + E)
    p["woa_row"] = u(ks[13], (1, Hh), Hh)
    p["boa"] = u(ks[14], (1, 1), Hh)
    return p


if __name__ == "__main__":
    # Small shapes consistent with the module: N batch, L seq, D=x_dim=state_dim,
    # Hh=hidden_dim, E=emb_size, K=candi_num.
    N, L = 2, 8
    x_dim = state_dim = hidden_dim = 32
    emb_size = 16
    candi_num = 8

    key = jax.random.PRNGKey(0)
    k_par, k_x, k_y = jax.random.split(key, 3)
    params = init_params(k_par, x_dim, state_dim, hidden_dim, emb_size)

    x = jax.random.normal(k_x, (N, L, x_dim), jnp.float32)             # history [N, L, D]
    y = jax.random.normal(k_y, (N, candi_num, emb_size), jnp.float32)  # action embeddings [N, K, E]

    qsa = jax.jit(qnet_forward)(params, x, y)
    qsa = jax.block_until_ready(qsa)

    ref = qnet_reference(params, x, y)
    assert qsa.shape == (N, candi_num)
    # bf16 MXU operands vs. f32-HIGHEST reference -> allow bf16-level drift.
    assert jnp.allclose(qsa, ref, rtol=2e-2, atol=2e-2), (qsa, ref)

    print("KERNEL_OK")
</pallas_src>

<mosaic_0001>
module attributes {stable_mosaic.version = 11 : i64} {
  func.func @qnet_kernel(%arg0: i32, %arg1: memref<8x8x32xbf16, #tpu.memory_space<vmem>>, %arg2: memref<8x8x16xbf16, #tpu.memory_space<vmem>>, %arg3: memref<3x32x32xbf16, #tpu.memory_space<vmem>>, %arg4: memref<3x32x32xbf16, #tpu.memory_space<vmem>>, %arg5: memref<3x1x32xf32, #tpu.memory_space<vmem>>, %arg6: memref<1x32xf32, #tpu.memory_space<vmem>>, %arg7: memref<32x32xbf16, #tpu.memory_space<vmem>>, %arg8: memref<1x32xf32, #tpu.memory_space<vmem>>, %arg9: memref<32x32xbf16, #tpu.memory_space<vmem>>, %arg10: memref<1x32xf32, #tpu.memory_space<vmem>>, %arg11: memref<1x32xf32, #tpu.memory_space<vmem>>, %arg12: memref<1x1xf32, #tpu.memory_space<vmem>>, %arg13: memref<32x32xbf16, #tpu.memory_space<vmem>>, %arg14: memref<16x32xbf16, #tpu.memory_space<vmem>>, %arg15: memref<1x32xf32, #tpu.memory_space<vmem>>, %arg16: memref<1x32xf32, #tpu.memory_space<vmem>>, %arg17: memref<1x1xf32, #tpu.memory_space<vmem>>, %arg18: memref<8x8xf32, #tpu.memory_space<vmem>>, %arg19: memref<8x8x32xf32, #tpu.memory_space<vmem>>, %arg20: memref<8x8x32xf32, #tpu.memory_space<vmem>>, %arg21: memref<8x8x32xf32, #tpu.memory_space<vmem>>, %arg22: memref<8x32xf32, #tpu.memory_space<vmem>>) attributes {dimension_semantics = [#tpu.dimension_semantics<parallel>], iteration_bounds = array<i64: 1>, scalar_prefetch = 0 : i64, scratch_operands = 4 : i64, tpu.core_type = #tpu.core_type<tc>, window_params = [{transform_indices = @transform_0, window_bounds = array<i64: 8, 8, 32>}, {transform_indices = @transform_1, window_bounds = array<i64: 8, 8, 16>}, {pipeline_mode = #tpu.pipeline_mode<synchronous>, transform_indices = @transform_2, window_bounds = array<i64: 3, 32, 32>}, {pipeline_mode = #tpu.pipeline_mode<synchronous>, transform_indices = @transform_3, window_bounds = array<i64: 3, 32, 32>}, {pipeline_mode = #tpu.pipeline_mode<synchronous>, transform_indices = @transform_4, window_bounds = array<i64: 3, 1, 32>}, {pipeline_mode = #tpu.pipeline_mode<synchronous>, transform_indices = @transform_5, window_bounds = array<i64: 1, 32>}, {pipeline_mode = #tpu.pipeline_mode<synchronous>, transform_indices = @transform_6, window_bounds = array<i64: 32, 32>}, {pipeline_mode = #tpu.pipeline_mode<synchronous>, transform_indices = @transform_7, window_bounds = array<i64: 1, 32>}, {pipeline_mode = #tpu.pipeline_mode<synchronous>, transform_indices = @transform_8, window_bounds = array<i64: 32, 32>}, {pipeline_mode = #tpu.pipeline_mode<synchronous>, transform_indices = @transform_9, window_bounds = array<i64: 1, 32>}, {pipeline_mode = #tpu.pipeline_mode<synchronous>, transform_indices = @transform_10, window_bounds = array<i64: 1, 32>}, {pipeline_mode = #tpu.pipeline_mode<synchronous>, transform_indices = @transform_11, window_bounds = array<i64: 1, 1>}, {pipeline_mode = #tpu.pipeline_mode<synchronous>, transform_indices = @transform_12, window_bounds = array<i64: 32, 32>}, {pipeline_mode = #tpu.pipeline_mode<synchronous>, transform_indices = @transform_13, window_bounds = array<i64: 16, 32>}, {pipeline_mode = #tpu.pipeline_mode<synchronous>, transform_indices = @transform_14, window_bounds = array<i64: 1, 32>}, {pipeline_mode = #tpu.pipeline_mode<synchronous>, transform_indices = @transform_15, window_bounds = array<i64: 1, 32>}, {pipeline_mode = #tpu.pipeline_mode<synchronous>, transform_indices = @transform_16, window_bounds = array<i64: 1, 1>}, {transform_indices = @transform_17, window_bounds = array<i64: 8, 8>}]} {
    %c0 = arith.constant 0 : index
    %c0_0 = arith.constant 0 : index
    %c0_1 = arith.constant 0 : index
    %0 = vector.load %arg1[%c0, %c0_0, %c0_1] : memref<8x8x32xbf16, #tpu.memory_space<vmem>>, vector<8x8x32xbf16>
    %1 = vector.shape_cast %0 : vector<8x8x32xbf16> to vector<64x32xbf16>
    %c0_2 = arith.constant 0 : index
    %c0_3 = arith.constant 0 : index
    %c0_4 = arith.constant 0 : index
    %2 = vector.load %arg3[%c0_2, %c0_3, %c0_4] : memref<3x32x32xbf16, #tpu.memory_space<vmem>>, vector<1x32x32xbf16>
    %3 = vector.shape_cast %2 : vector<1x32x32xbf16> to vector<32x32xbf16>
    %cst = arith.constant dense<0.000000e+00> : vector<64x32xf32>
    %4 = tpu.matmul %1, %3, %cst {dimension_numbers = #tpu.dot_dimension_numbers<[1], [0], [0], [1], [0, 0, 1, 1], [], []>} : vector<64x32xbf16>, vector<32x32xbf16>, vector<64x32xf32> -> vector<64x32xf32>
    %c0_5 = arith.constant 0 : index
    %c0_6 = arith.constant 0 : index
    %c0_7 = arith.constant 0 : index
    %5 = vector.load %arg5[%c0_5, %c0_6, %c0_7] : memref<3x1x32xf32, #tpu.memory_space<vmem>>, vector<1x1x32xf32>
    %6 = vector.shape_cast %5 : vector<1x1x32xf32> to vector<1x32xf32>
    %7 = vector.broadcast %6 : vector<1x32xf32> to vector<64x32xf32>
    %8 = arith.addf %4, %7 : vector<64x32xf32>
    %9 = vector.shape_cast %8 : vector<64x32xf32> to vector<8x8x32xf32>
    %c0_8 = arith.constant 0 : index
    %c0_9 = arith.constant 0 : index
    %c0_10 = arith.constant 0 : index
    %10 = vector.load %arg19[%c0_8, %c0_9, %c0_10] : memref<8x8x32xf32, #tpu.memory_space<vmem>>, vector<8x8x32xf32>
    tpu.vector_store %arg19[%c0_8, %c0_9, %c0_10], %9 {strides = array<i32>} : memref<8x8x32xf32, #tpu.memory_space<vmem>>, vector<8x8x32xf32>,
    %c1 = arith.constant 1 : index
    %c0_11 = arith.constant 0 : index
    %c0_12 = arith.constant 0 : index
    %11 = vector.load %arg3[%c1, %c0_11, %c0_12] : memref<3x32x32xbf16, #tpu.memory_space<vmem>>, vector<1x32x32xbf16>
    %12 = vector.shape_cast %11 : vector<1x32x32xbf16> to vector<32x32xbf16>
    %cst_13 = arith.constant dense<0.000000e+00> : vector<64x32xf32>
    %13 = tpu.matmul %1, %12, %cst_13 {dimension_numbers = #tpu.dot_dimension_numbers<[1], [0], [0], [1], [0, 0, 1, 1], [], []>} : vector<64x32xbf16>, vector<32x32xbf16>, vector<64x32xf32> -> vector<64x32xf32>
    %c1_14 = arith.constant 1 : index
    %c0_15 = arith.constant 0 : index
    %c0_16 = arith.constant 0 : index
    %14 = vector.load %arg5[%c1_14, %c0_15, %c0_16] : memref<3x1x32xf32, #tpu.memory_space<vmem>>, vector<1x1x32xf32>
    %15 = vector.shape_cast %14 : vector<1x1x32xf32> to vector<1x32xf32>
    %16 = vector.broadcast %15 : vector<1x32xf32> to vector<64x32xf32>
    %17 = arith.addf %13, %16 : vector<64x32xf32>
    %18 = vector.shape_cast %17 : vector<64x32xf32> to vector<8x8x32xf32>
    %c0_17 = arith.constant 0 : index
    %c0_18 = arith.constant 0 : index
    %c0_19 = arith.constant 0 : index
    %19 = vector.load %arg20[%c0_17, %c0_18, %c0_19] : memref<8x8x32xf32, #tpu.memory_space<vmem>>, vector<8x8x32xf32>
    tpu.vector_store %arg20[%c0_17, %c0_18, %c0_19], %18 {strides = array<i32>} : memref<8x8x32xf32, #tpu.memory_space<vmem>>, vector<8x8x32xf32>,
    %c2 = arith.constant 2 : index
    %c0_20 = arith.constant 0 : index
    %c0_21 = arith.constant 0 : index
    %20 = vector.load %arg3[%c2, %c0_20, %c0_21] : memref<3x32x32xbf16, #tpu.memory_space<vmem>>, vector<1x32x32xbf16>
    %21 = vector.shape_cast %20 : vector<1x32x32xbf16> to vector<32x32xbf16>
    %cst_22 = arith.constant dense<0.000000e+00> : vector<64x32xf32>
    %22 = tpu.matmul %1, %21, %cst_22 {dimension_numbers = #tpu.dot_dimension_numbers<[1], [0], [0], [1], [0, 0, 1, 1], [], []>} : vector<64x32xbf16>, vector<32x32xbf16>, vector<64x32xf32> -> vector<64x32xf32>
    %c2_23 = arith.constant 2 : index
    %c0_24 = arith.constant 0 : index
    %c0_25 = arith.constant 0 : index
    %23 = vector.load %arg5[%c2_23, %c0_24, %c0_25] : memref<3x1x32xf32, #tpu.memory_space<vmem>>, vector<1x1x32xf32>
    %24 = vector.shape_cast %23 : vector<1x1x32xf32> to vector<1x32xf32>
    %25 = vector.broadcast %24 : vector<1x32xf32> to vector<64x32xf32>
    %26 = arith.addf %22, %25 : vector<64x32xf32>
    %27 = vector.shape_cast %26 : vector<64x32xf32> to vector<8x8x32xf32>
    %c0_26 = arith.constant 0 : index
    %c0_27 = arith.constant 0 : index
    %c0_28 = arith.constant 0 : index
    %28 = vector.load %arg21[%c0_26, %c0_27, %c0_28] : memref<8x8x32xf32, #tpu.memory_space<vmem>>, vector<8x8x32xf32>
    tpu.vector_store %arg21[%c0_26, %c0_27, %c0_28], %27 {strides = array<i32>} : memref<8x8x32xf32, #tpu.memory_space<vmem>>, vector<8x8x32xf32>,
    %cst_29 = arith.constant 0.000000e+00 : f32
    %29 = vector.broadcast %cst_29 : f32 to vector<8x32xf32>
    %c0_30 = arith.constant 0 : index
    %c0_31 = arith.constant 0 : index
    %30 = vector.load %arg22[%c0_30, %c0_31] : memref<8x32xf32, #tpu.memory_space<vmem>>, vector<8x32xf32>
    tpu.vector_store %arg22[%c0_30, %c0_31], %29 {strides = array<i32>} : memref<8x32xf32, #tpu.memory_space<vmem>>, vector<8x32xf32>,
    %c0_32 = arith.constant 0 : index
    %c0_33 = arith.constant 0 : index
    %31 = vector.load %arg22[%c0_32, %c0_33] : memref<8x32xf32, #tpu.memory_space<vmem>>, vector<8x32xf32>
    %32 = arith.truncf %31 : vector<8x32xf32> to vector<8x32xbf16>
    %c0_34 = arith.constant 0 : index
    %c0_35 = arith.constant 0 : index
    %c0_36 = arith.constant 0 : index
    %33 = vector.load %arg4[%c0_34, %c0_35, %c0_36] : memref<3x32x32xbf16, #tpu.memory_space<vmem>>, vector<1x32x32xbf16>
    %34 = vector.shape_cast %33 : vector<1x32x32xbf16> to vector<32x32xbf16>
    %cst_37 = arith.constant dense<0.000000e+00> : vector<8x32xf32>
    %35 = tpu.matmul %32, %34, %cst_37 {dimension_numbers = #tpu.dot_dimension_numbers<[1], [0], [0], [1], [0, 0, 1, 1], [], []>} : vector<8x32xbf16>, vector<32x32xbf16>, vector<8x32xf32> -> vector<8x32xf32>
    %c1_38 = arith.constant 1 : index
    %c0_39 = arith.constant 0 : index
    %c0_40 = arith.constant 0 : index
    %36 = vector.load %arg4[%c1_38, %c0_39, %c0_40] : memref<3x32x32xbf16, #tpu.memory_space<vmem>>, vector<1x32x32xbf16>
    %37 = vector.shape_cast %36 : vector<1x32x32xbf16> to vector<32x32xbf16>
    %cst_41 = arith.constant dense<0.000000e+00> : vector<8x32xf32>
    %38 = tpu.matmul %32, %37, %cst_41 {dimension_numbers = #tpu.dot_dimension_numbers<[1], [0], [0], [1], [0, 0, 1, 1], [], []>} : vector<8x32xbf16>, vector<32x32xbf16>, vector<8x32xf32> -> vector<8x32xf32>
    %c2_42 = arith.constant 2 : index
    %c0_43 = arith.constant 0 : index
    %c0_44 = arith.constant 0 : index
    %39 = vector.load %arg4[%c2_42, %c0_43, %c0_44] : memref<3x32x32xbf16, #tpu.memory_space<vmem>>, vector<1x32x32xbf16>
    %40 = vector.shape_cast %39 : vector<1x32x32xbf16> to vector<32x32xbf16>
    %cst_45 = arith.constant dense<0.000000e+00> : vector<8x32xf32>
    %41 = tpu.matmul %32, %40, %cst_45 {dimension_numbers = #tpu.dot_dimension_numbers<[1], [0], [0], [1], [0, 0, 1, 1], [], []>} : vector<8x32xbf16>, vector<32x32xbf16>, vector<8x32xf32> -> vector<8x32xf32>
    %c0_46 = arith.constant 0 : index
    %c0_47 = arith.constant 0 : index
    %42 = vector.load %arg6[%c0_46, %c0_47] : memref<1x32xf32, #tpu.memory_space<vmem>>, vector<1x32xf32>
    %43 = vector.broadcast %42 : vector<1x32xf32> to vector<8x32xf32>
    %44 = arith.addf %41, %43 : vector<8x32xf32>
    %c0_48 = arith.constant 0 : index
    %c0_49 = arith.constant 0 : index
    %c0_50 = arith.constant 0 : index
    %45 = vector.load %arg19[%c0_48, %c0_49, %c0_50] : memref<8x8x32xf32, #tpu.memory_space<vmem>>, vector<1x8x32xf32>
    %46 = vector.shape_cast %45 : vector<1x8x32xf32> to vector<8x32xf32>
    %47 = arith.addf %46, %35 : vector<8x32xf32>
    %48 = arith.negf %47 : vector<8x32xf32>
    %49 = math.exp %48 : vector<8x32xf32>
    %cst_51 = arith.constant 1.000000e+00 : f32
    %50 = vector.broadcast %cst_51 : f32 to vector<8x32xf32>
    %51 = arith.addf %50, %49 : vector<8x32xf32>
    %52 = arith.divf %50, %51 : vector<8x32xf32>
    %c0_52 = arith.constant 0 : index
    %c0_53 = arith.constant 0 : index
    %c0_54 = arith.constant 0 : index
    %53 = vector.load %arg20[%c0_52, %c0_53, %c0_54] : memref<8x8x32xf32, #tpu.memory_space<vmem>>, vector<1x8x32xf32>
    %54 = vector.shape_cast %53 : vector<1x8x32xf32> to vector<8x32xf32>
    %55 = arith.addf %54, %38 : vector<8x32xf32>
    %56 = arith.negf %55 : vector<8x32xf32>
    %57 = math.exp %56 : vector<8x32xf32>
    %cst_55 = arith.constant 1.000000e+00 : f32
    %58 = vector.broadcast %cst_55 : f32 to vector<8x32xf32>
    %59 = arith.addf %58, %57 : vector<8x32xf32>
    %60 = arith.divf %58, %59 : vector<8x32xf32>
    %c0_56 = arith.constant 0 : index
    %c0_57 = arith.constant 0 : index
    %c0_58 = arith.constant 0 : index
    %61 = vector.load %arg21[%c0_56, %c0_57, %c0_58] : memref<8x8x32xf32, #tpu.memory_space<vmem>>, vector<1x8x32xf32>
    %62 = vector.shape_cast %61 : vector<1x8x32xf32> to vector<8x32xf32>
    %63 = arith.mulf %52, %44 : vector<8x32xf32>
    %64 = arith.addf %62, %63 : vector<8x32xf32>
    %65 = math.tanh %64 : vector<8x32xf32>
    %cst_59 = arith.constant 1.000000e+00 : f32
    %66 = vector.broadcast %cst_59 : f32 to vector<8x32xf32>
    %67 = arith.subf %66, %60 : vector<8x32xf32>
    %68 = arith.mulf %67, %65 : vector<8x32xf32>
    %69 = arith.mulf %60, %31 : vector<8x32xf32>
    %70 = arith.addf %68, %69 : vector<8x32xf32>
    %c0_60 = arith.constant 0 : index
    %c0_61 = arith.constant 0 : index
    %71 = vector.load %arg22[%c0_60, %c0_61] : memref<8x32xf32, #tpu.memory_space<vmem>>, vector<8x32xf32>
    tpu.vector_store %arg22[%c0_60, %c0_61], %70 {strides = array<i32>} : memref<8x32xf32, #tpu.memory_space<vmem>>, vector<8x32xf32>,
    %c0_62 = arith.constant 0 : index
    %c0_63 = arith.constant 0 : index
    %72 = vector.load %arg22[%c0_62, %c0_63] : memref<8x32xf32, #tpu.memory_space<vmem>>, vector<8x32xf32>
    %73 = arith.truncf %72 : vector<8x32xf32> to vector<8x32xbf16>
    %c0_64 = arith.constant 0 : index
    %c0_65 = arith.constant 0 : index
    %c0_66 = arith.constant 0 : index
    %74 = vector.load %arg4[%c0_64, %c0_65, %c0_66] : memref<3x32x32xbf16, #tpu.memory_space<vmem>>, vector<1x32x32xbf16>
    %75 = vector.shape_cast %74 : vector<1x32x32xbf16> to vector<32x32xbf16>
    %cst_67 = arith.constant dense<0.000000e+00> : vector<8x32xf32>
    %76 = tpu.matmul %73, %75, %cst_67 {dimension_numbers = #tpu.dot_dimension_numbers<[1], [0], [0], [1], [0, 0, 1, 1], [], []>} : vector<8x32xbf16>, vector<32x32xbf16>, vector<8x32xf32> -> vector<8x32xf32>
    %c1_68 = arith.constant 1 : index
    %c0_69 = arith.constant 0 : index
    %c0_70 = arith.constant 0 : index
    %77 = vector.load %arg4[%c1_68, %c0_69, %c0_70] : memref<3x32x32xbf16, #tpu.memory_space<vmem>>, vector<1x32x32xbf16>
    %78 = vector.shape_cast %77 : vector<1x32x32xbf16> to vector<32x32xbf16>
    %cst_71 = arith.constant dense<0.000000e+00> : vector<8x32xf32>
    %79 = tpu.matmul %73, %78, %cst_71 {dimension_numbers = #tpu.dot_dimension_numbers<[1], [0], [0], [1], [0, 0, 1, 1], [], []>} : vector<8x32xbf16>, vector<32x32xbf16>, vector<8x32xf32> -> vector<8x32xf32>
    %c2_72 = arith.constant 2 : index
    %c0_73 = arith.constant 0 : index
    %c0_74 = arith.constant 0 : index
    %80 = vector.load %arg4[%c2_72, %c0_73, %c0_74] : memref<3x32x32xbf16, #tpu.memory_space<vmem>>, vector<1x32x32xbf16>
    %81 = vector.shape_cast %80 : vector<1x32x32xbf16> to vector<32x32xbf16>
    %cst_75 = arith.constant dense<0.000000e+00> : vector<8x32xf32>
    %82 = tpu.matmul %73, %81, %cst_75 {dimension_numbers = #tpu.dot_dimension_numbers<[1], [0], [0], [1], [0, 0, 1, 1], [], []>} : vector<8x32xbf16>, vector<32x32xbf16>, vector<8x32xf32> -> vector<8x32xf32>
    %c0_76 = arith.constant 0 : index
    %c0_77 = arith.constant 0 : index
    %83 = vector.load %arg6[%c0_76, %c0_77] : memref<1x32xf32, #tpu.memory_space<vmem>>, vector<1x32xf32>
    %84 = vector.broadcast %83 : vector<1x32xf32> to vector<8x32xf32>
    %85 = arith.addf %82, %84 : vector<8x32xf32>
    %c1_78 = arith.constant 1 : index
    %c0_79 = arith.constant 0 : index
    %c0_80 = arith.constant 0 : index
    %86 = vector.load %arg19[%c1_78, %c0_79, %c0_80] : memref<8x8x32xf32, #tpu.memory_space<vmem>>, vector<1x8x32xf32>
    %87 = vector.shape_cast %86 : vector<1x8x32xf32> to vector<8x32xf32>
    %88 = arith.addf %87, %76 : vector<8x32xf32>
    %89 = arith.negf %88 : vector<8x32xf32>
    %90 = math.exp %89 : vector<8x32xf32>
    %cst_81 = arith.constant 1.000000e+00 : f32
    %91 = vector.broadcast %cst_81 : f32 to vector<8x32xf32>
    %92 = arith.addf %91, %90 : vector<8x32xf32>
    %93 = arith.divf %91, %92 : vector<8x32xf32>
    %c1_82 = arith.constant 1 : index
    %c0_83 = arith.constant 0 : index
    %c0_84 = arith.constant 0 : index
    %94 = vector.load %arg20[%c1_82, %c0_83, %c0_84] : memref<8x8x32xf32, #tpu.memory_space<vmem>>, vector<1x8x32xf32>
    %95 = vector.shape_cast %94 : vector<1x8x32xf32> to vector<8x32xf32>
    %96 = arith.addf %95, %79 : vector<8x32xf32>
    %97 = arith.negf %96 : vector<8x32xf32>
    %98 = math.exp %97 : vector<8x32xf32>
    %cst_85 = arith.constant 1.000000e+00 : f32
    %99 = vector.broadcast %cst_85 : f32 to vector<8x32xf32>
    %100 = arith.addf %99, %98 : vector<8x32xf32>
    %101 = arith.divf %99, %100 : vector<8x32xf32>
    %c1_86 = arith.constant 1 : index
    %c0_87 = arith.constant 0 : index
    %c0_88 = arith.constant 0 : index
    %102 = vector.load %arg21[%c1_86, %c0_87, %c0_88] : memref<8x8x32xf32, #tpu.memory_space<vmem>>, vector<1x8x32xf32>
    %103 = vector.shape_cast %102 : vector<1x8x32xf32> to vector<8x32xf32>
    %104 = arith.mulf %93, %85 : vector<8x32xf32>
    %105 = arith.addf %103, %104 : vector<8x32xf32>
    %106 = math.tanh %105 : vector<8x32xf32>
    %cst_89 = arith.constant 1.000000e+00 : f32
    %107 = vector.broadcast %cst_89 : f32 to vector<8x32xf32>
    %108 = arith.subf %107, %101 : vector<8x32xf32>
    %109 = arith.mulf %108, %106 : vector<8x32xf32>
    %110 = arith.mulf %101, %72 : vector<8x32xf32>
    %111 = arith.addf %109, %110 : vector<8x32xf32>
    %c0_90 = arith.constant 0 : index
    %c0_91 = arith.constant 0 : index
    %112 = vector.load %arg22[%c0_90, %c0_91] : memref<8x32xf32, #tpu.memory_space<vmem>>, vector<8x32xf32>
    tpu.vector_store %arg22[%c0_90, %c0_91], %111 {strides = array<i32>} : memref<8x32xf32, #tpu.memory_space<vmem>>, vector<8x32xf32>,
    %c0_92 = arith.constant 0 : index
    %c0_93 = arith.constant 0 : index
    %113 = vector.load %arg22[%c0_92, %c0_93] : memref<8x32xf32, #tpu.memory_space<vmem>>, vector<8x32xf32>
    %114 = arith.truncf %113 : vector<8x32xf32> to vector<8x32xbf16>
    %c0_94 = arith.constant 0 : index
    %c0_95 = arith.constant 0 : index
    %c0_96 = arith.constant 0 : index
    %115 = vector.load %arg4[%c0_94, %c0_95, %c0_96] : memref<3x32x32xbf16, #tpu.memory_space<vmem>>, vector<1x32x32xbf16>
    %116 = vector.shape_cast %115 : vector<1x32x32xbf16> to vector<32x32xbf16>
    %cst_97 = arith.constant dense<0.000000e+00> : vector<8x32xf32>
    %117 = tpu.matmul %114, %116, %cst_97 {dimension_numbers = #tpu.dot_dimension_numbers<[1], [0], [0], [1], [0, 0, 1, 1], [], []>} : vector<8x32xbf16>, vector<32x32xbf16>, vector<8x32xf32> -> vector<8x32xf32>
    %c1_98 = arith.constant 1 : index
    %c0_99 = arith.constant 0 : index
    %c0_100 = arith.constant 0 : index
    %118 = vector.load %arg4[%c1_98, %c0_99, %c0_100] : memref<3x32x32xbf16, #tpu.memory_space<vmem>>, vector<1x32x32xbf16>
    %119 = vector.shape_cast %118 : vector<1x32x32xbf16> to vector<32x32xbf16>
    %cst_101 = arith.constant dense<0.000000e+00> : vector<8x32xf32>
    %120 = tpu.matmul %114, %119, %cst_101 {dimension_numbers = #tpu.dot_dimension_numbers<[1], [0], [0], [1], [0, 0, 1, 1], [], []>} : vector<8x32xbf16>, vector<32x32xbf16>, vector<8x32xf32> -> vector<8x32xf32>
    %c2_102 = arith.constant 2 : index
    %c0_103 = arith.constant 0 : index
    %c0_104 = arith.constant 0 : index
    %121 = vector.load %arg4[%c2_102, %c0_103, %c0_104] : memref<3x32x32xbf16, #tpu.memory_space<vmem>>, vector<1x32x32xbf16>
    %122 = vector.shape_cast %121 : vector<1x32x32xbf16> to vector<32x32xbf16>
    %cst_105 = arith.constant dense<0.000000e+00> : vector<8x32xf32>
    %123 = tpu.matmul %114, %122, %cst_105 {dimension_numbers = #tpu.dot_dimension_numbers<[1], [0], [0], [1], [0, 0, 1, 1], [], []>} : vector<8x32xbf16>, vector<32x32xbf16>, vector<8x32xf32> -> vector<8x32xf32>
    %c0_106 = arith.constant 0 : index
    %c0_107 = arith.constant 0 : index
    %124 = vector.load %arg6[%c0_106, %c0_107] : memref<1x32xf32, #tpu.memory_space<vmem>>, vector<1x32xf32>
    %125 = vector.broadcast %124 : vector<1x32xf32> to vector<8x32xf32>
    %126 = arith.addf %123, %125 : vector<8x32xf32>
    %c2_108 = arith.constant 2 : index
    %c0_109 = arith.constant 0 : index
    %c0_110 = arith.constant 0 : index
    %127 = vector.load %arg19[%c2_108, %c0_109, %c0_110] : memref<8x8x32xf32, #tpu.memory_space<vmem>>, vector<1x8x32xf32>
    %128 = vector.shape_cast %127 : vector<1x8x32xf32> to vector<8x32xf32>
    %129 = arith.addf %128, %117 : vector<8x32xf32>
    %130 = arith.negf %129 : vector<8x32xf32>
    %131 = math.exp %130 : vector<8x32xf32>
    %cst_111 = arith.constant 1.000000e+00 : f32
    %132 = vector.broadcast %cst_111 : f32 to vector<8x32xf32>
    %133 = arith.addf %132, %131 : vector<8x32xf32>
    %134 = arith.divf %132, %133 : vector<8x32xf32>
    %c2_112 = arith.constant 2 : index
    %c0_113 = arith.constant 0 : index
    %c0_114 = arith.constant 0 : index
    %135 = vector.load %arg20[%c2_112, %c0_113, %c0_114] : memref<8x8x32xf32, #tpu.memory_space<vmem>>, vector<1x8x32xf32>
    %136 = vector.shape_cast %135 : vector<1x8x32xf32> to vector<8x32xf32>
    %137 = arith.addf %136, %120 : vector<8x32xf32>
    %138 = arith.negf %137 : vector<8x32xf32>
    %139 = math.exp %138 : vector<8x32xf32>
    %cst_115 = arith.constant 1.000000e+00 : f32
    %140 = vector.broadcast %cst_115 : f32 to vector<8x32xf32>
    %141 = arith.addf %140, %139 : vector<8x32xf32>
    %142 = arith.divf %140, %141 : vector<8x32xf32>
    %c2_116 = arith.constant 2 : index
    %c0_117 = arith.constant 0 : index
    %c0_118 = arith.constant 0 : index
    %143 = vector.load %arg21[%c2_116, %c0_117, %c0_118] : memref<8x8x32xf32, #tpu.memory_space<vmem>>, vector<1x8x32xf32>
    %144 = vector.shape_cast %143 : vector<1x8x32xf32> to vector<8x32xf32>
    %145 = arith.mulf %134, %126 : vector<8x32xf32>
    %146 = arith.addf %144, %145 : vector<8x32xf32>
    %147 = math.tanh %146 : vector<8x32xf32>
    %cst_119 = arith.constant 1.000000e+00 : f32
    %148 = vector.broadcast %cst_119 : f32 to vector<8x32xf32>
    %149 = arith.subf %148, %142 : vector<8x32xf32>
    %150 = arith.mulf %149, %147 : vector<8x32xf32>
    %151 = arith.mulf %142, %113 : vector<8x32xf32>
    %152 = arith.addf %150, %151 : vector<8x32xf32>
    %c0_120 = arith.constant 0 : index
    %c0_121 = arith.constant 0 : index
    %153 = vector.load %arg22[%c0_120, %c0_121] : memref<8x32xf32, #tpu.memory_space<vmem>>, vector<8x32xf32>
    tpu.vector_store %arg22[%c0_120, %c0_121], %152 {strides = array<i32>} : memref<8x32xf32, #tpu.memory_space<vmem>>, vector<8x32xf32>,
    %c0_122 = arith.constant 0 : index
    %c0_123 = arith.constant 0 : index
    %154 = vector.load %arg22[%c0_122, %c0_123] : memref<8x32xf32, #tpu.memory_space<vmem>>, vector<8x32xf32>
    %155 = arith.truncf %154 : vector<8x32xf32> to vector<8x32xbf16>
    %c0_124 = arith.constant 0 : index
    %c0_125 = arith.constant 0 : index
    %c0_126 = arith.constant 0 : index
    %156 = vector.load %arg4[%c0_124, %c0_125, %c0_126] : memref<3x32x32xbf16, #tpu.memory_space<vmem>>, vector<1x32x32xbf16>
    %157 = vector.shape_cast %156 : vector<1x32x32xbf16> to vector<32x32xbf16>
    %cst_127 = arith.constant dense<0.000000e+00> : vector<8x32xf32>
    %158 = tpu.matmul %155, %157, %cst_127 {dimension_numbers = #tpu.dot_dimension_numbers<[1], [0], [0], [1], [0, 0, 1, 1], [], []>} : vector<8x32xbf16>, vector<32x32xbf16>, vector<8x32xf32> -> vector<8x32xf32>
    %c1_128 = arith.constant 1 : index
    %c0_129 = arith.constant 0 : index
    %c0_130 = arith.constant 0 : index
    %159 = vector.load %arg4[%c1_128, %c0_129, %c0_130] : memref<3x32x32xbf16, #tpu.memory_space<vmem>>, vector<1x32x32xbf16>
    %160 = vector.shape_cast %159 : vector<1x32x32xbf16> to vector<32x32xbf16>
    %cst_131 = arith.constant dense<0.000000e+00> : vector<8x32xf32>
    %161 = tpu.matmul %155, %160, %cst_131 {dimension_numbers = #tpu.dot_dimension_numbers<[1], [0], [0], [1], [0, 0, 1, 1], [], []>} : vector<8x32xbf16>, vector<32x32xbf16>, vector<8x32xf32> -> vector<8x32xf32>
    %c2_132 = arith.constant 2 : index
    %c0_133 = arith.constant 0 : index
    %c0_134 = arith.constant 0 : index
    %162 = vector.load %arg4[%c2_132, %c0_133, %c0_134] : memref<3x32x32xbf16, #tpu.memory_space<vmem>>, vector<1x32x32xbf16>
    %163 = vector.shape_cast %162 : vector<1x32x32xbf16> to vector<32x32xbf16>
    %cst_135 = arith.constant dense<0.000000e+00> : vector<8x32xf32>
    %164 = tpu.matmul %155, %163, %cst_135 {dimension_numbers = #tpu.dot_dimension_numbers<[1], [0], [0], [1], [0, 0, 1, 1], [], []>} : vector<8x32xbf16>, vector<32x32xbf16>, vector<8x32xf32> -> vector<8x32xf32>
    %c0_136 = arith.constant 0 : index
    %c0_137 = arith.constant 0 : index
    %165 = vector.load %arg6[%c0_136, %c0_137] : memref<1x32xf32, #tpu.memory_space<vmem>>, vector<1x32xf32>
    %166 = vector.broadcast %165 : vector<1x32xf32> to vector<8x32xf32>
    %167 = arith.addf %164, %166 : vector<8x32xf32>
    %c3 = arith.constant 3 : index
    %c0_138 = arith.constant 0 : index
    %c0_139 = arith.constant 0 : index
    %168 = vector.load %arg19[%c3, %c0_138, %c0_139] : memref<8x8x32xf32, #tpu.memory_space<vmem>>, vector<1x8x32xf32>
    %169 = vector.shape_cast %168 : vector<1x8x32xf32> to vector<8x32xf32>
    %170 = arith.addf %169, %158 : vector<8x32xf32>
    %171 = arith.negf %170 : vector<8x32xf32>
    %172 = math.exp %171 : vector<8x32xf32>
    %cst_140 = arith.constant 1.000000e+00 : f32
    %173 = vector.broadcast %cst_140 : f32 to vector<8x32xf32>
    %174 = arith.addf %173, %172 : vector<8x32xf32>
    %175 = arith.divf %173, %174 : vector<8x32xf32>
    %c3_141 = arith.constant 3 : index
    %c0_142 = arith.constant 0 : index
    %c0_143 = arith.constant 0 : index
    %176 = vector.load %arg20[%c3_141, %c0_142, %c0_143] : memref<8x8x32xf32, #tpu.memory_space<vmem>>, vector<1x8x32xf32>
    %177 = vector.shape_cast %176 : vector<1x8x32xf32> to vector<8x32xf32>
    %178 = arith.addf %177, %161 : vector<8x32xf32>
    %179 = arith.negf %178 : vector<8x32xf32>
    %180 = math.exp %179 : vector<8x32xf32>
    %cst_144 = arith.constant 1.000000e+00 : f32
    %181 = vector.broadcast %cst_144 : f32 to vector<8x32xf32>
    %182 = arith.addf %181, %180 : vector<8x32xf32>
    %183 = arith.divf %181, %182 : vector<8x32xf32>
    %c3_145 = arith.constant 3 : index
    %c0_146 = arith.constant 0 : index
    %c0_147 = arith.constant 0 : index
    %184 = vector.load %arg21[%c3_145, %c0_146, %c0_147] : memref<8x8x32xf32, #tpu.memory_space<vmem>>, vector<1x8x32xf32>
    %185 = vector.shape_cast %184 : vector<1x8x32xf32> to vector<8x32xf32>
    %186 = arith.mulf %175, %167 : vector<8x32xf32>
    %187 = arith.addf %185, %186 : vector<8x32xf32>
    %188 = math.tanh %187 : vector<8x32xf32>
    %cst_148 = arith.constant 1.000000e+00 : f32
    %189 = vector.broadcast %cst_148 : f32 to vector<8x32xf32>
    %190 = arith.subf %189, %183 : vector<8x32xf32>
    %191 = arith.mulf %190, %188 : vector<8x32xf32>
    %192 = arith.mulf %183, %154 : vector<8x32xf32>
    %193 = arith.addf %191, %192 : vector<8x32xf32>
    %c0_149 = arith.constant 0 : index
    %c0_150 = arith.constant 0 : index
    %194 = vector.load %arg22[%c0_149, %c0_150] : memref<8x32xf32, #tpu.memory_space<vmem>>, vector<8x32xf32>
    tpu.vector_store %arg22[%c0_149, %c0_150], %193 {strides = array<i32>} : memref<8x32xf32, #tpu.memory_space<vmem>>, vector<8x32xf32>,
    %c0_151 = arith.constant 0 : index
    %c0_152 = arith.constant 0 : index
    %195 = vector.load %arg22[%c0_151, %c0_152] : memref<8x32xf32, #tpu.memory_space<vmem>>, vector<8x32xf32>
    %196 = arith.truncf %195 : vector<8x32xf32> to vector<8x32xbf16>
    %c0_153 = arith.constant 0 : index
    %c0_154 = arith.constant 0 : index
    %c0_155 = arith.constant 0 : index
    %197 = vector.load %arg4[%c0_153, %c0_154, %c0_155] : memref<3x32x32xbf16, #tpu.memory_space<vmem>>, vector<1x32x32xbf16>
    %198 = vector.shape_cast %197 : vector<1x32x32xbf16> to vector<32x32xbf16>
    %cst_156 = arith.constant dense<0.000000e+00> : vector<8x32xf32>
    %199 = tpu.matmul %196, %198, %cst_156 {dimension_numbers = #tpu.dot_dimension_numbers<[1], [0], [0], [1], [0, 0, 1, 1], [], []>} : vector<8x32xbf16>, vector<32x32xbf16>, vector<8x32xf32> -> vector<8x32xf32>
    %c1_157 = arith.constant 1 : index
    %c0_158 = arith.constant 0 : index
    %c0_159 = arith.constant 0 : index
    %200 = vector.load %arg4[%c1_157, %c0_158, %c0_159] : memref<3x32x32xbf16, #tpu.memory_space<vmem>>, vector<1x32x32xbf16>
    %201 = vector.shape_cast %200 : vector<1x32x32xbf16> to vector<32x32xbf16>
    %cst_160 = arith.constant dense<0.000000e+00> : vector<8x32xf32>
    %202 = tpu.matmul %196, %201, %cst_160 {dimension_numbers = #tpu.dot_dimension_numbers<[1], [0], [0], [1], [0, 0, 1, 1], [], []>} : vector<8x32xbf16>, vector<32x32xbf16>, vector<8x32xf32> -> vector<8x32xf32>
    %c2_161 = arith.constant 2 : index
    %c0_162 = arith.constant 0 : index
    %c0_163 = arith.constant 0 : index
    %203 = vector.load %arg4[%c2_161, %c0_162, %c0_163] : memref<3x32x32xbf16, #tpu.memory_space<vmem>>, vector<1x32x32xbf16>
    %204 = vector.shape_cast %203 : vector<1x32x32xbf16> to vector<32x32xbf16>
    %cst_164 = arith.constant dense<0.000000e+00> : vector<8x32xf32>
    %205 = tpu.matmul %196, %204, %cst_164 {dimension_numbers = #tpu.dot_dimension_numbers<[1], [0], [0], [1], [0, 0, 1, 1], [], []>} : vector<8x32xbf16>, vector<32x32xbf16>, vector<8x32xf32> -> vector<8x32xf32>
    %c0_165 = arith.constant 0 : index
    %c0_166 = arith.constant 0 : index
    %206 = vector.load %arg6[%c0_165, %c0_166] : memref<1x32xf32, #tpu.memory_space<vmem>>, vector<1x32xf32>
    %207 = vector.broadcast %206 : vector<1x32xf32> to vector<8x32xf32>
    %208 = arith.addf %205, %207 : vector<8x32xf32>
    %c4 = arith.constant 4 : index
    %c0_167 = arith.constant 0 : index
    %c0_168 = arith.constant 0 : index
    %209 = vector.load %arg19[%c4, %c0_167, %c0_168] : memref<8x8x32xf32, #tpu.memory_space<vmem>>, vector<1x8x32xf32>
    %210 = vector.shape_cast %209 : vector<1x8x32xf32> to vector<8x32xf32>
    %211 = arith.addf %210, %199 : vector<8x32xf32>
    %212 = arith.negf %211 : vector<8x32xf32>
    %213 = math.exp %212 : vector<8x32xf32>
    %cst_169 = arith.constant 1.000000e+00 : f32
    %214 = vector.broadcast %cst_169 : f32 to vector<8x32xf32>
    %215 = arith.addf %214, %213 : vector<8x32xf32>
    %216 = arith.divf %214, %215 : vector<8x32xf32>
    %c4_170 = arith.constant 4 : index
    %c0_171 = arith.constant 0 : index
    %c0_172 = arith.constant 0 : index
    %217 = vector.load %arg20[%c4_170, %c0_171, %c0_172] : memref<8x8x32xf32, #tpu.memory_space<vmem>>, vector<1x8x32xf32>
    %218 = vector.shape_cast %217 : vector<1x8x32xf32> to vector<8x32xf32>
    %219 = arith.addf %218, %202 : vector<8x32xf32>
    %220 = arith.negf %219 : vector<8x32xf32>
    %221 = math.exp %220 : vector<8x32xf32>
    %cst_173 = arith.constant 1.000000e+00 : f32
    %222 = vector.broadcast %cst_173 : f32 to vector<8x32xf32>
    %223 = arith.addf %222, %221 : vector<8x32xf32>
    %224 = arith.divf %222, %223 : vector<8x32xf32>
    %c4_174 = arith.constant 4 : index
    %c0_175 = arith.constant 0 : index
    %c0_176 = arith.constant 0 : index
    %225 = vector.load %arg21[%c4_174, %c0_175, %c0_176] : memref<8x8x32xf32, #tpu.memory_space<vmem>>, vector<1x8x32xf32>
    %226 = vector.shape_cast %225 : vector<1x8x32xf32> to vector<8x32xf32>
    %227 = arith.mulf %216, %208 : vector<8x32xf32>
    %228 = arith.addf %226, %227 : vector<8x32xf32>
    %229 = math.tanh %228 : vector<8x32xf32>
    %cst_177 = arith.constant 1.000000e+00 : f32
    %230 = vector.broadcast %cst_177 : f32 to vector<8x32xf32>
    %231 = arith.subf %230, %224 : vector<8x32xf32>
    %232 = arith.mulf %231, %229 : vector<8x32xf32>
    %233 = arith.mulf %224, %195 : vector<8x32xf32>
    %234 = arith.addf %232, %233 : vector<8x32xf32>
    %c0_178 = arith.constant 0 : index
    %c0_179 = arith.constant 0 : index
    %235 = vector.load %arg22[%c0_178, %c0_179] : memref<8x32xf32, #tpu.memory_space<vmem>>, vector<8x32xf32>
    tpu.vector_store %arg22[%c0_178, %c0_179], %234 {strides = array<i32>} : memref<8x32xf32, #tpu.memory_space<vmem>>, vector<8x32xf32>,
    %c0_180 = arith.constant 0 : index
    %c0_181 = arith.constant 0 : index
    %236 = vector.load %arg22[%c0_180, %c0_181] : memref<8x32xf32, #tpu.memory_space<vmem>>, vector<8x32xf32>
    %237 = arith.truncf %236 : vector<8x32xf32> to vector<8x32xbf16>
    %c0_182 = arith.constant 0 : index
    %c0_183 = arith.constant 0 : index
    %c0_184 = arith.constant 0 : index
    %238 = vector.load %arg4[%c0_182, %c0_183, %c0_184] : memref<3x32x32xbf16, #tpu.memory_space<vmem>>, vector<1x32x32xbf16>
    %239 = vector.shape_cast %238 : vector<1x32x32xbf16> to vector<32x32xbf16>
    %cst_185 = arith.constant dense<0.000000e+00> : vector<8x32xf32>
    %240 = tpu.matmul %237, %239, %cst_185 {dimension_numbers = #tpu.dot_dimension_numbers<[1], [0], [0], [1], [0, 0, 1, 1], [], []>} : vector<8x32xbf16>, vector<32x32xbf16>, vector<8x32xf32> -> vector<8x32xf32>
    %c1_186 = arith.constant 1 : index
    %c0_187 = arith.constant 0 : index
    %c0_188 = arith.constant 0 : index
    %241 = vector.load %arg4[%c1_186, %c0_187, %c0_188] : memref<3x32x32xbf16, #tpu.memory_space<vmem>>, vector<1x32x32xbf16>
    %242 = vector.shape_cast %241 : vector<1x32x32xbf16> to vector<32x32xbf16>
    %cst_189 = arith.constant dense<0.000000e+00> : vector<8x32xf32>
    %243 = tpu.matmul %237, %242, %cst_189 {dimension_numbers = #tpu.dot_dimension_numbers<[1], [0], [0], [1], [0, 0, 1, 1], [], []>} : vector<8x32xbf16>, vector<32x32xbf16>, vector<8x32xf32> -> vector<8x32xf32>
    %c2_190 = arith.constant 2 : index
    %c0_191 = arith.constant 0 : index
    %c0_192 = arith.constant 0 : index
    %244 = vector.load %arg4[%c2_190, %c0_191, %c0_192] : memref<3x32x32xbf16, #tpu.memory_space<vmem>>, vector<1x32x32xbf16>
    %245 = vector.shape_cast %244 : vector<1x32x32xbf16> to vector<32x32xbf16>
    %cst_193 = arith.constant dense<0.000000e+00> : vector<8x32xf32>
    %246 = tpu.matmul %237, %245, %cst_193 {dimension_numbers = #tpu.dot_dimension_numbers<[1], [0], [0], [1], [0, 0, 1, 1], [], []>} : vector<8x32xbf16>, vector<32x32xbf16>, vector<8x32xf32> -> vector<8x32xf32>
    %c0_194 = arith.constant 0 : index
    %c0_195 = arith.constant 0 : index
    %247 = vector.load %arg6[%c0_194, %c0_195] : memref<1x32xf32, #tpu.memory_space<vmem>>, vector<1x32xf32>
    %248 = vector.broadcast %247 : vector<1x32xf32> to vector<8x32xf32>
    %249 = arith.addf %246, %248 : vector<8x32xf32>
    %c5 = arith.constant 5 : index
    %c0_196 = arith.constant 0 : index
    %c0_197 = arith.constant 0 : index
    %250 = vector.load %arg19[%c5, %c0_196, %c0_197] : memref<8x8x32xf32, #tpu.memory_space<vmem>>, vector<1x8x32xf32>
    %251 = vector.shape_cast %250 : vector<1x8x32xf32> to vector<8x32xf32>
    %252 = arith.addf %251, %240 : vector<8x32xf32>
    %253 = arith.negf %252 : vector<8x32xf32>
    %254 = math.exp %253 : vector<8x32xf32>
    %cst_198 = arith.constant 1.000000e+00 : f32
    %255 = vector.broadcast %cst_198 : f32 to vector<8x32xf32>
    %256 = arith.addf %255, %254 : vector<8x32xf32>
    %257 = arith.divf %255, %256 : vector<8x32xf32>
    %c5_199 = arith.constant 5 : index
    %c0_200 = arith.constant 0 : index
    %c0_201 = arith.constant 0 : index
    %258 = vector.load %arg20[%c5_199, %c0_200, %c0_201] : memref<8x8x32xf32, #tpu.memory_space<vmem>>, vector<1x8x32xf32>
    %259 = vector.shape_cast %258 : vector<1x8x32xf32> to vector<8x32xf32>
    %260 = arith.addf %259, %243 : vector<8x32xf32>
    %261 = arith.negf %260 : vector<8x32xf32>
    %262 = math.exp %261 : vector<8x32xf32>
    %cst_202 = arith.constant 1.000000e+00 : f32
    %263 = vector.broadcast %cst_202 : f32 to vector<8x32xf32>
    %264 = arith.addf %263, %262 : vector<8x32xf32>
    %265 = arith.divf %263, %264 : vector<8x32xf32>
    %c5_203 = arith.constant 5 : index
    %c0_204 = arith.constant 0 : index
    %c0_205 = arith.constant 0 : index
    %266 = vector.load %arg21[%c5_203, %c0_204, %c0_205] : memref<8x8x32xf32, #tpu.memory_space<vmem>>, vector<1x8x32xf32>
    %267 = vector.shape_cast %266 : vector<1x8x32xf32> to vector<8x32xf32>
    %268 = arith.mulf %257, %249 : vector<8x32xf32>
    %269 = arith.addf %267, %268 : vector<8x32xf32>
    %270 = math.tanh %269 : vector<8x32xf32>
    %cst_206 = arith.constant 1.000000e+00 : f32
    %271 = vector.broadcast %cst_206 : f32 to vector<8x32xf32>
    %272 = arith.subf %271, %265 : vector<8x32xf32>
    %273 = arith.mulf %272, %270 : vector<8x32xf32>
    %274 = arith.mulf %265, %236 : vector<8x32xf32>
    %275 = arith.addf %273, %274 : vector<8x32xf32>
    %c0_207 = arith.constant 0 : index
    %c0_208 = arith.constant 0 : index
    %276 = vector.load %arg22[%c0_207, %c0_208] : memref<8x32xf32, #tpu.memory_space<vmem>>, vector<8x32xf32>
    tpu.vector_store %arg22[%c0_207, %c0_208], %275 {strides = array<i32>} : memref<8x32xf32, #tpu.memory_space<vmem>>, vector<8x32xf32>,
    %c0_209 = arith.constant 0 : index
    %c0_210 = arith.constant 0 : index
    %277 = vector.load %arg22[%c0_209, %c0_210] : memref<8x32xf32, #tpu.memory_space<vmem>>, vector<8x32xf32>
    %278 = arith.truncf %277 : vector<8x32xf32> to vector<8x32xbf16>
    %c0_211 = arith.constant 0 : index
    %c0_212 = arith.constant 0 : index
    %c0_213 = arith.constant 0 : index
    %279 = vector.load %arg4[%c0_211, %c0_212, %c0_213] : memref<3x32x32xbf16, #tpu.memory_space<vmem>>, vector<1x32x32xbf16>
    %280 = vector.shape_cast %279 : vector<1x32x32xbf16> to vector<32x32xbf16>
    %cst_214 = arith.constant dense<0.000000e+00> : vector<8x32xf32>
    %281 = tpu.matmul %278, %280, %cst_214 {dimension_numbers = #tpu.dot_dimension_numbers<[1], [0], [0], [1], [0, 0, 1, 1], [], []>} : vector<8x32xbf16>, vector<32x32xbf16>, vector<8x32xf32> -> vector<8x32xf32>
    %c1_215 = arith.constant 1 : index
    %c0_216 = arith.constant 0 : index
    %c0_217 = arith.constant 0 : index
    %282 = vector.load %arg4[%c1_215, %c0_216, %c0_217] : memref<3x32x32xbf16, #tpu.memory_space<vmem>>, vector<1x32x32xbf16>
    %283 = vector.shape_cast %282 : vector<1x32x32xbf16> to vector<32x32xbf16>
    %cst_218 = arith.constant dense<0.000000e+00> : vector<8x32xf32>
    %284 = tpu.matmul %278, %283, %cst_218 {dimension_numbers = #tpu.dot_dimension_numbers<[1], [0], [0], [1], [0, 0, 1, 1], [], []>} : vector<8x32xbf16>, vector<32x32xbf16>, vector<8x32xf32> -> vector<8x32xf32>
    %c2_219 = arith.constant 2 : index
    %c0_220 = arith.constant 0 : index
    %c0_221 = arith.constant 0 : index
    %285 = vector.load %arg4[%c2_219, %c0_220, %c0_221] : memref<3x32x32xbf16, #tpu.memory_space<vmem>>, vector<1x32x32xbf16>
    %286 = vector.shape_cast %285 : vector<1x32x32xbf16> to vector<32x32xbf16>
    %cst_222 = arith.constant dense<0.000000e+00> : vector<8x32xf32>
    %287 = tpu.matmul %278, %286, %cst_222 {dimension_numbers = #tpu.dot_dimension_numbers<[1], [0], [0], [1], [0, 0, 1, 1], [], []>} : vector<8x32xbf16>, vector<32x32xbf16>, vector<8x32xf32> -> vector<8x32xf32>
    %c0_223 = arith.constant 0 : index
    %c0_224 = arith.constant 0 : index
    %288 = vector.load %arg6[%c0_223, %c0_224] : memref<1x32xf32, #tpu.memory_space<vmem>>, vector<1x32xf32>
    %289 = vector.broadcast %288 : vector<1x32xf32> to vector<8x32xf32>
    %290 = arith.addf %287, %289 : vector<8x32xf32>
    %c6 = arith.constant 6 : index
    %c0_225 = arith.constant 0 : index
    %c0_226 = arith.constant 0 : index
    %291 = vector.load %arg19[%c6, %c0_225, %c0_226] : memref<8x8x32xf32, #tpu.memory_space<vmem>>, vector<1x8x32xf32>
    %292 = vector.shape_cast %291 : vector<1x8x32xf32> to vector<8x32xf32>
    %293 = arith.addf %292, %281 : vector<8x32xf32>
    %294 = arith.negf %293 : vector<8x32xf32>
    %295 = math.exp %294 : vector<8x32xf32>
    %cst_227 = arith.constant 1.000000e+00 : f32
    %296 = vector.broadcast %cst_227 : f32 to vector<8x32xf32>
    %297 = arith.addf %296, %295 : vector<8x32xf32>
    %298 = arith.divf %296, %297 : vector<8x32xf32>
    %c6_228 = arith.constant 6 : index
    %c0_229 = arith.constant 0 : index
    %c0_230 = arith.constant 0 : index
    %299 = vector.load %arg20[%c6_228, %c0_229, %c0_230] : memref<8x8x32xf32, #tpu.memory_space<vmem>>, vector<1x8x32xf32>
    %300 = vector.shape_cast %299 : vector<1x8x32xf32> to vector<8x32xf32>
    %301 = arith.addf %300, %284 : vector<8x32xf32>
    %302 = arith.negf %301 : vector<8x32xf32>
    %303 = math.exp %302 : vector<8x32xf32>
    %cst_231 = arith.constant 1.000000e+00 : f32
    %304 = vector.broadcast %cst_231 : f32 to vector<8x32xf32>
    %305 = arith.addf %304, %303 : vector<8x32xf32>
    %306 = arith.divf %304, %305 : vector<8x32xf32>
    %c6_232 = arith.constant 6 : index
    %c0_233 = arith.constant 0 : index
    %c0_234 = arith.constant 0 : index
    %307 = vector.load %arg21[%c6_232, %c0_233, %c0_234] : memref<8x8x32xf32, #tpu.memory_space<vmem>>, vector<1x8x32xf32>
    %308 = vector.shape_cast %307 : vector<1x8x32xf32> to vector<8x32xf32>
    %309 = arith.mulf %298, %290 : vector<8x32xf32>
    %310 = arith.addf %308, %309 : vector<8x32xf32>
    %311 = math.tanh %310 : vector<8x32xf32>
    %cst_235 = arith.constant 1.000000e+00 : f32
    %312 = vector.broadcast %cst_235 : f32 to vector<8x32xf32>
    %313 = arith.subf %312, %306 : vector<8x32xf32>
    %314 = arith.mulf %313, %311 : vector<8x32xf32>
    %315 = arith.mulf %306, %277 : vector<8x32xf32>
    %316 = arith.addf %314, %315 : vector<8x32xf32>
    %c0_236 = arith.constant 0 : index
    %c0_237 = arith.constant 0 : index
    %317 = vector.load %arg22[%c0_236, %c0_237] : memref<8x32xf32, #tpu.memory_space<vmem>>, vector<8x32xf32>
    tpu.vector_store %arg22[%c0_236, %c0_237], %316 {strides = array<i32>} : memref<8x32xf32, #tpu.memory_space<vmem>>, vector<8x32xf32>,
    %c0_238 = arith.constant 0 : index
    %c0_239 = arith.constant 0 : index
    %318 = vector.load %arg22[%c0_238, %c0_239] : memref<8x32xf32, #tpu.memory_space<vmem>>, vector<8x32xf32>
    %319 = arith.truncf %318 : vector<8x32xf32> to vector<8x32xbf16>
    %c0_240 = arith.constant 0 : index
    %c0_241 = arith.constant 0 : index
    %c0_242 = arith.constant 0 : index
    %320 = vector.load %arg4[%c0_240, %c0_241, %c0_242] : memref<3x32x32xbf16, #tpu.memory_space<vmem>>, vector<1x32x32xbf16>
    %321 = vector.shape_cast %320 : vector<1x32x32xbf16> to vector<32x32xbf16>
    %cst_243 = arith.constant dense<0.000000e+00> : vector<8x32xf32>
    %322 = tpu.matmul %319, %321, %cst_243 {dimension_numbers = #tpu.dot_dimension_numbers<[1], [0], [0], [1], [0, 0, 1, 1], [], []>} : vector<8x32xbf16>, vector<32x32xbf16>, vector<8x32xf32> -> vector<8x32xf32>
    %c1_244 = arith.constant 1 : index
    %c0_245 = arith.constant 0 : index
    %c0_246 = arith.constant 0 : index
    %323 = vector.load %arg4[%c1_244, %c0_245, %c0_246] : memref<3x32x32xbf16, #tpu.memory_space<vmem>>, vector<1x32x32xbf16>
    %324 = vector.shape_cast %323 : vector<1x32x32xbf16> to vector<32x32xbf16>
    %cst_247 = arith.constant dense<0.000000e+00> : vector<8x32xf32>
    %325 = tpu.matmul %319, %324, %cst_247 {dimension_numbers = #tpu.dot_dimension_numbers<[1], [0], [0], [1], [0, 0, 1, 1], [], []>} : vector<8x32xbf16>, vector<32x32xbf16>, vector<8x32xf32> -> vector<8x32xf32>
    %c2_248 = arith.constant 2 : index
    %c0_249 = arith.constant 0 : index
    %c0_250 = arith.constant 0 : index
    %326 = vector.load %arg4[%c2_248, %c0_249, %c0_250] : memref<3x32x32xbf16, #tpu.memory_space<vmem>>, vector<1x32x32xbf16>
    %327 = vector.shape_cast %326 : vector<1x32x32xbf16> to vector<32x32xbf16>
    %cst_251 = arith.constant dense<0.000000e+00> : vector<8x32xf32>
    %328 = tpu.matmul %319, %327, %cst_251 {dimension_numbers = #tpu.dot_dimension_numbers<[1], [0], [0], [1], [0, 0, 1, 1], [], []>} : vector<8x32xbf16>, vector<32x32xbf16>, vector<8x32xf32> -> vector<8x32xf32>
    %c0_252 = arith.constant 0 : index
    %c0_253 = arith.constant 0 : index
    %329 = vector.load %arg6[%c0_252, %c0_253] : memref<1x32xf32, #tpu.memory_space<vmem>>, vector<1x32xf32>
    %330 = vector.broadcast %329 : vector<1x32xf32> to vector<8x32xf32>
    %331 = arith.addf %328, %330 : vector<8x32xf32>
    %c7 = arith.constant 7 : index
    %c0_254 = arith.constant 0 : index
    %c0_255 = arith.constant 0 : index
    %332 = vector.load %arg19[%c7, %c0_254, %c0_255] : memref<8x8x32xf32, #tpu.memory_space<vmem>>, vector<1x8x32xf32>
    %333 = vector.shape_cast %332 : vector<1x8x32xf32> to vector<8x32xf32>
    %334 = arith.addf %333, %322 : vector<8x32xf32>
    %335 = arith.negf %334 : vector<8x32xf32>
    %336 = math.exp %335 : vector<8x32xf32>
    %cst_256 = arith.constant 1.000000e+00 : f32
    %337 = vector.broadcast %cst_256 : f32 to vector<8x32xf32>
    %338 = arith.addf %337, %336 : vector<8x32xf32>
    %339 = arith.divf %337, %338 : vector<8x32xf32>
    %c7_257 = arith.constant 7 : index
    %c0_258 = arith.constant 0 : index
    %c0_259 = arith.constant 0 : index
    %340 = vector.load %arg20[%c7_257, %c0_258, %c0_259] : memref<8x8x32xf32, #tpu.memory_space<vmem>>, vector<1x8x32xf32>
    %341 = vector.shape_cast %340 : vector<1x8x32xf32> to vector<8x32xf32>
    %342 = arith.addf %341, %325 : vector<8x32xf32>
    %343 = arith.negf %342 : vector<8x32xf32>
    %344 = math.exp %343 : vector<8x32xf32>
    %cst_260 = arith.constant 1.000000e+00 : f32
    %345 = vector.broadcast %cst_260 : f32 to vector<8x32xf32>
    %346 = arith.addf %345, %344 : vector<8x32xf32>
    %347 = arith.divf %345, %346 : vector<8x32xf32>
    %c7_261 = arith.constant 7 : index
    %c0_262 = arith.constant 0 : index
    %c0_263 = arith.constant 0 : index
    %348 = vector.load %arg21[%c7_261, %c0_262, %c0_263] : memref<8x8x32xf32, #tpu.memory_space<vmem>>, vector<1x8x32xf32>
    %349 = vector.shape_cast %348 : vector<1x8x32xf32> to vector<8x32xf32>
    %350 = arith.mulf %339, %331 : vector<8x32xf32>
    %351 = arith.addf %349, %350 : vector<8x32xf32>
    %352 = math.tanh %351 : vector<8x32xf32>
    %cst_264 = arith.constant 1.000000e+00 : f32
    %353 = vector.broadcast %cst_264 : f32 to vector<8x32xf32>
    %354 = arith.subf %353, %347 : vector<8x32xf32>
    %355 = arith.mulf %354, %352 : vector<8x32xf32>
    %356 = arith.mulf %347, %318 : vector<8x32xf32>
    %357 = arith.addf %355, %356 : vector<8x32xf32>
    %c0_265 = arith.constant 0 : index
    %c0_266 = arith.constant 0 : index
    %358 = vector.load %arg22[%c0_265, %c0_266] : memref<8x32xf32, #tpu.memory_space<vmem>>, vector<8x32xf32>
    tpu.vector_store %arg22[%c0_265, %c0_266], %357 {strides = array<i32>} : memref<8x32xf32, #tpu.memory_space<vmem>>, vector<8x32xf32>,
    %c0_267 = arith.constant 0 : index
    %c0_268 = arith.constant 0 : index
    %359 = vector.load %arg22[%c0_267, %c0_268] : memref<8x32xf32, #tpu.memory_space<vmem>>, vector<8x32xf32>
    %360 = arith.truncf %359 : vector<8x32xf32> to vector<8x32xbf16>
    %c0_269 = arith.constant 0 : index
    %c0_270 = arith.constant 0 : index
    %361 = vector.load %arg7[%c0_269, %c0_270] : memref<32x32xbf16, #tpu.memory_space<vmem>>, vector<32x32xbf16>
    %cst_271 = arith.constant dense<0.000000e+00> : vector<8x32xf32>
    %362 = tpu.matmul %360, %361, %cst_271 {dimension_numbers = #tpu.dot_dimension_numbers<[1], [0], [0], [1], [0, 0, 1, 1], [], []>} : vector<8x32xbf16>, vector<32x32xbf16>, vector<8x32xf32> -> vector<8x32xf32>
    %c0_272 = arith.constant 0 : index
    %c0_273 = arith.constant 0 : index
    %363 = vector.load %arg8[%c0_272, %c0_273] : memref<1x32xf32, #tpu.memory_space<vmem>>, vector<1x32xf32>
    %364 = vector.broadcast %363 : vector<1x32xf32> to vector<8x32xf32>
    %365 = arith.addf %362, %364 : vector<8x32xf32>
    %cst_274 = arith.constant 0.000000e+00 : f32
    %366 = vector.broadcast %cst_274 : f32 to vector<8x32xf32>
    %367 = arith.maximumf %365, %366 : vector<8x32xf32>
    %368 = arith.truncf %367 : vector<8x32xf32> to vector<8x32xbf16>
    %c0_275 = arith.constant 0 : index
    %c0_276 = arith.constant 0 : index
    %369 = vector.load %arg9[%c0_275, %c0_276] : memref<32x32xbf16, #tpu.memory_space<vmem>>, vector<32x32xbf16>
    %cst_277 = arith.constant dense<0.000000e+00> : vector<8x32xf32>
    %370 = tpu.matmul %368, %369, %cst_277 {dimension_numbers = #tpu.dot_dimension_numbers<[1], [0], [0], [1], [0, 0, 1, 1], [], []>} : vector<8x32xbf16>, vector<32x32xbf16>, vector<8x32xf32> -> vector<8x32xf32>
    %c0_278 = arith.constant 0 : index
    %c0_279 = arith.constant 0 : index
    %371 = vector.load %arg10[%c0_278, %c0_279] : memref<1x32xf32, #tpu.memory_space<vmem>>, vector<1x32xf32>
    %372 = vector.broadcast %371 : vector<1x32xf32> to vector<8x32xf32>
    %373 = arith.addf %370, %372 : vector<8x32xf32>
    %cst_280 = arith.constant 0.000000e+00 : f32
    %374 = vector.broadcast %cst_280 : f32 to vector<8x32xf32>
    %375 = arith.maximumf %373, %374 : vector<8x32xf32>
    %c0_281 = arith.constant 0 : index
    %c0_282 = arith.constant 0 : index
    %376 = vector.load %arg11[%c0_281, %c0_282] : memref<1x32xf32, #tpu.memory_space<vmem>>, vector<1x32xf32>
    %377 = vector.broadcast %376 : vector<1x32xf32> to vector<8x32xf32>
    %378 = arith.mulf %375, %377 : vector<8x32xf32>
    %cst_283 = arith.constant dense<0.000000e+00> : vector<8xf32>
    %379 = vector.multi_reduction <add>, %378, %cst_283 [1] : vector<8x32xf32> to vector<8xf32>
    %380 = vector.shape_cast %379 : vector<8xf32> to vector<8x1xf32>
    %c0_284 = arith.constant 0 : index
    %c0_285 = arith.constant 0 : index
    %381 = vector.load %arg12[%c0_284, %c0_285] : memref<1x1xf32, #tpu.memory_space<vmem>>, vector<1x1xf32>
    %382 = vector.broadcast %381 : vector<1x1xf32> to vector<8x1xf32>
    %383 = arith.addf %380, %382 : vector<8x1xf32>
    %c0_286 = arith.constant 0 : index
    %c0_287 = arith.constant 0 : index
    %384 = vector.load %arg13[%c0_286, %c0_287] : memref<32x32xbf16, #tpu.memory_space<vmem>>, vector<32x32xbf16>
    %cst_288 = arith.constant dense<0.000000e+00> : vector<8x32xf32>
    %385 = tpu.matmul %368, %384, %cst_288 {dimension_numbers = #tpu.dot_dimension_numbers<[1], [0], [0], [1], [0, 0, 1, 1], [], []>} : vector<8x32xbf16>, vector<32x32xbf16>, vector<8x32xf32> -> vector<8x32xf32>
    %c0_289 = arith.constant 0 : index
    %c0_290 = arith.constant 0 : index
    %c0_291 = arith.constant 0 : index
    %386 = vector.load %arg2[%c0_289, %c0_290, %c0_291] : memref<8x8x16xbf16, #tpu.memory_space<vmem>>, vector<8x8x16xbf16>
    %387 = vector.shape_cast %386 : vector<8x8x16xbf16> to vector<64x16xbf16>
    %c0_292 = arith.constant 0 : index
    %c0_293 = arith.constant 0 : index
    %388 = vector.load %arg14[%c0_292, %c0_293] : memref<16x32xbf16, #tpu.memory_space<vmem>>, vector<16x32xbf16>
    %cst_294 = arith.constant dense<0.000000e+00> : vector<64x32xf32>
    %389 = tpu.matmul %387, %388, %cst_294 {dimension_numbers = #tpu.dot_dimension_numbers<[1], [0], [0], [1], [0, 0, 1, 1], [], []>} : vector<64x16xbf16>, vector<16x32xbf16>, vector<64x32xf32> -> vector<64x32xf32>
    %390 = vector.shape_cast %389 : vector<64x32xf32> to vector<8x8x32xf32>
    %391 = vector.shape_cast %385 : vector<8x32xf32> to vector<8x1x32xf32>
    %392 = vector.broadcast %391 : vector<8x1x32xf32> to vector<8x8x32xf32>
    %393 = arith.addf %392, %390 : vector<8x8x32xf32>
    %c0_295 = arith.constant 0 : index
    %c0_296 = arith.constant 0 : index
    %394 = vector.load %arg15[%c0_295, %c0_296] : memref<1x32xf32, #tpu.memory_space<vmem>>, vector<1x32xf32>
    %395 = vector.shape_cast %394 : vector<1x32xf32> to vector<1x1x32xf32>
    %396 = vector.broadcast %395 : vector<1x1x32xf32> to vector<8x8x32xf32>
    %397 = arith.addf %393, %396 : vector<8x8x32xf32>
    %cst_297 = arith.constant 0.000000e+00 : f32
    %398 = vector.broadcast %cst_297 : f32 to vector<8x8x32xf32>
    %399 = arith.maximumf %397, %398 : vector<8x8x32xf32>
    %c0_298 = arith.constant 0 : index
    %c0_299 = arith.constant 0 : index
    %400 = vector.load %arg16[%c0_298, %c0_299] : memref<1x32xf32, #tpu.memory_space<vmem>>, vector<1x32xf32>
    %401 = vector.shape_cast %400 : vector<1x32xf32> to vector<1x1x32xf32>
    %402 = vector.broadcast %401 : vector<1x1x32xf32> to vector<8x8x32xf32>
    %403 = arith.mulf %399, %402 : vector<8x8x32xf32>
    %cst_300 = arith.constant dense<0.000000e+00> : vector<8x8xf32>
    %404 = vector.multi_reduction <add>, %403, %cst_300 [2] : vector<8x8x32xf32> to vector<8x8xf32>
    %c0_301 = arith.constant 0 : index
    %c0_302 = arith.constant 0 : index
    %405 = vector.load %arg17[%c0_301, %c0_302] : memref<1x1xf32, #tpu.memory_space<vmem>>, vector<1x1xf32>
    %406 = vector.broadcast %405 : vector<1x1xf32> to vector<8x8xf32>
    %407 = arith.addf %404, %406 : vector<8x8xf32>
    %408 = vector.broadcast %383 : vector<8x1xf32> to vector<8x8xf32>
    %409 = arith.addf %407, %408 : vector<8x8xf32>
    %cst_303 = arith.constant dense<0.000000e+00> : vector<8xf32>
    %410 = vector.multi_reduction <add>, %407, %cst_303 [1] : vector<8x8xf32> to vector<8xf32>
    %411 = vector.shape_cast %410 : vector<8xf32> to vector<8x1xf32>
    %cst_304 = arith.constant 8.000000e+00 : f32
    %412 = vector.broadcast %cst_304 : f32 to vector<8x1xf32>
    %413 = arith.divf %411, %412 : vector<8x1xf32>
    %414 = vector.broadcast %413 : vector<8x1xf32> to vector<8x8xf32>
    %415 = arith.subf %409, %414 : vector<8x8xf32>
    %c0_305 = arith.constant 0 : index
    %c0_306 = arith.constant 0 : index
    %416 = vector.load %arg18[%c0_305, %c0_306] : memref<8x8xf32, #tpu.memory_space<vmem>>, vector<8x8xf32>
    tpu.vector_store %arg18[%c0_305, %c0_306], %415 {strides = array<i32>} : memref<8x8xf32, #tpu.memory_space<vmem>>, vector<8x8xf32>,
    return
  }
  func.func @transform_0(%arg0: i32) -> (i32, i32, i32) {
    %c0_i32 = arith.constant 0 : i32
    %c0_i32_0 = arith.constant 0 : i32
    %c0_i32_1 = arith.constant 0 : i32
    return %c0_i32, %arg0, %c0_i32_0 : i32, i32, i32
  }
  func.func @transform_1(%arg0: i32) -> (i32, i32, i32) {
    %c0_i32 = arith.constant 0 : i32
    %c0_i32_0 = arith.constant 0 : i32
    %c0_i32_1 = arith.constant 0 : i32
    return %arg0, %c0_i32, %c0_i32_0 : i32, i32, i32
  }
  func.func @transform_2(%arg0: i32) -> (i32, i32, i32) {
    %c0_i32 = arith.constant 0 : i32
    %c0_i32_0 = arith.constant 0 : i32
    %c0_i32_1 = arith.constant 0 : i32
    %c0_i32_2 = arith.constant 0 : i32
    return %c0_i32, %c0_i32_0, %c0_i32_1 : i32, i32, i32
  }
  func.func @transform_3(%arg0: i32) -> (i32, i32, i32) {
    %c0_i32 = arith.constant 0 : i32
    %c0_i32_0 = arith.constant 0 : i32
    %c0_i32_1 = arith.constant 0 : i32
    %c0_i32_2 = arith.constant 0 : i32
    return %c0_i32, %c0_i32_0, %c0_i32_1 : i32, i32, i32
  }
  func.func @transform_4(%arg0: i32) -> (i32, i32, i32) {
    %c0_i32 = arith.constant 0 : i32
    %c0_i32_0 = arith.constant 0 : i32
    %c0_i32_1 = arith.constant 0 : i32
    %c0_i32_2 = arith.constant 0 : i32
    return %c0_i32, %c0_i32_0, %c0_i32_1 : i32, i32, i32
  }
  func.func @transform_5(%arg0: i32) -> (i32, i32) {
    %c0_i32 = arith.constant 0 : i32
    %c0_i32_0 = arith.constant 0 : i32
    %c0_i32_1 = arith.constant 0 : i32
    return %c0_i32, %c0_i32_0 : i32, i32
  }
  func.func @transform_6(%arg0: i32) -> (i32, i32) {
    %c0_i32 = arith.constant 0 : i32
    %c0_i32_0 = arith.constant 0 : i32
    %c0_i32_1 = arith.constant 0 : i32
    return %c0_i32, %c0_i32_0 : i32, i32
  }
  func.func @transform_7(%arg0: i32) -> (i32, i32) {
    %c0_i32 = arith.constant 0 : i32
    %c0_i32_0 = arith.constant 0 : i32
    %c0_i32_1 = arith.constant 0 : i32
    return %c0_i32, %c0_i32_0 : i32, i32
  }
  func.func @transform_8(%arg0: i32) -> (i32, i32) {
    %c0_i32 = arith.constant 0 : i32
    %c0_i32_0 = arith.constant 0 : i32
    %c0_i32_1 = arith.constant 0 : i32
    return %c0_i32, %c0_i32_0 : i32, i32
  }
  func.func @transform_9(%arg0: i32) -> (i32, i32) {
    %c0_i32 = arith.constant 0 : i32
    %c0_i32_0 = arith.constant 0 : i32
    %c0_i32_1 = arith.constant 0 : i32
    return %c0_i32, %c0_i32_0 : i32, i32
  }
  func.func @transform_10(%arg0: i32) -> (i32, i32) {
    %c0_i32 = arith.constant 0 : i32
    %c0_i32_0 = arith.constant 0 : i32
    %c0_i32_1 = arith.constant 0 : i32
    return %c0_i32, %c0_i32_0 : i32, i32
  }
  func.func @transform_11(%arg0: i32) -> (i32, i32) {
    %c0_i32 = arith.constant 0 : i32
    %c0_i32_0 = arith.constant 0 : i32
    %c0_i32_1 = arith.constant 0 : i32
    return %c0_i32, %c0_i32_0 : i32, i32
  }
  func.func @transform_12(%arg0: i32) -> (i32, i32) {
    %c0_i32 = arith.constant 0 : i32
    %c0_i32_0 = arith.constant 0 : i32
    %c0_i32_1 = arith.constant 0 : i32
    return %c0_i32, %c0_i32_0 : i32, i32
  }
  func.func @transform_13(%arg0: i32) -> (i32, i32) {
    %c0_i32 = arith.constant 0 : i32
    %c0_i32_0 = arith.constant 0 : i32
    %c0_i32_1 = arith.constant 0 : i32
    return %c0_i32, %c0_i32_0 : i32, i32
  }
  func.func @transform_14(%arg0: i32) -> (i32, i32) {
    %c0_i32 = arith.constant 0 : i32
    %c0_i32_0 = arith.constant 0 : i32
    %c0_i32_1 = arith.constant 0 : i32
    return %c0_i32, %c0_i32_0 : i32, i32
  }
  func.func @transform_15(%arg0: i32) -> (i32, i32) {
    %c0_i32 = arith.constant 0 : i32
    %c0_i32_0 = arith.constant 0 : i32
    %c0_i32_1 = arith.constant 0 : i32
    return %c0_i32, %c0_i32_0 : i32, i32
  }
  func.func @transform_16(%arg0: i32) -> (i32, i32) {
    %c0_i32 = arith.constant 0 : i32
    %c0_i32_0 = arith.constant 0 : i32
    %c0_i32_1 = arith.constant 0 : i32
    return %c0_i32, %c0_i32_0 : i32, i32
  }
  func.func @transform_17(%arg0: i32) -> (i32, i32) {
    %c0_i32 = arith.constant 0 : i32
    %c0_i32_0 = arith.constant 0 : i32
    return %arg0, %c0_i32 : i32, i32
  }
}

</mosaic_0001>

<llo_original>
// kernel: qnet_forward.1
$region0: #{qnet_forward.1}
  #allocation0 [shape = 'u32[]', space=smem, size = 0x4, offset = 0x4, fixed_abs, tag = 'smem constant byte address 0x4 - core index']
  #allocation1 [shape = 'u32[72,128]{1,0:T(1,128)}', space=vmem, size = 0x9000, scoped, tag = 'internal scratch']
  #allocation2 [shape = 'f32[8,8,32]{2,1,0:T(8,128)}', space=vmem, size = 0x8000, scoped, tag = 'scratch operand']
  #allocation3 [shape = 'f32[8,8,32]{2,1,0:T(8,128)}', space=vmem, size = 0x8000, scoped, tag = 'scratch operand']
  #allocation4 [shape = 'f32[8,8,32]{2,1,0:T(8,128)}', space=vmem, size = 0x8000, scoped, tag = 'scratch operand']
  #allocation5 [shape = 'f32[8,32]{1,0:T(8,128)}', space=vmem, size = 0x1000, scoped, tag = 'scratch operand']
  #allocation6 [shape = 'f32[1,1]{1,0:T(1,128)S(1)}', space=vmem, size = 0x200, scoped, tag = 'scoped memory for qnet_forward.1']
  #allocation7 [shape = 'f32[1,1]{1,0:T(1,128)S(1)}', space=vmem, size = 0x200, scoped, tag = 'scoped memory for qnet_forward.1']
  %s0 = inlined_call_operand.vmem [shape: bf16[8,8,32], index: 0, kind: input, shape index: {}]
  %s1 = inlined_call_operand.vmem [shape: bf16[8,8,16], index: 1, kind: input, shape index: {}]
  %s2 = inlined_call_operand.vmem [shape: bf16[3,32,32], index: 2, kind: input, shape index: {}]
  %s3 = inlined_call_operand.vmem [shape: bf16[3,32,32], index: 3, kind: input, shape index: {}]
  %s4 = inlined_call_operand.vmem [shape: f32[3,1,32], index: 4, kind: input, shape index: {}]
  %s5 = inlined_call_operand.vmem [shape: f32[1,32], index: 5, kind: input, shape index: {}]
  %s6 = inlined_call_operand.vmem [shape: bf16[32,32], index: 6, kind: input, shape index: {}]
  %s7 = inlined_call_operand.vmem [shape: f32[1,32], index: 7, kind: input, shape index: {}]
  %s8 = inlined_call_operand.vmem [shape: bf16[32,32], index: 8, kind: input, shape index: {}]
  %s9 = inlined_call_operand.vmem [shape: f32[1,32], index: 9, kind: input, shape index: {}]
  %s10 = inlined_call_operand.vmem [shape: f32[1,32], index: 10, kind: input, shape index: {}]
  %s11 = inlined_call_operand.<no memory space> [shape: f32[1,1], index: 11, kind: input, shape index: {}]
  %s12 = inlined_call_operand.vmem [shape: bf16[32,32], index: 12, kind: input, shape index: {}]
  %s13 = inlined_call_operand.vmem [shape: bf16[16,32], index: 13, kind: input, shape index: {}]
  %s14 = inlined_call_operand.vmem [shape: f32[1,32], index: 14, kind: input, shape index: {}]
  %s15 = inlined_call_operand.vmem [shape: f32[1,32], index: 15, kind: input, shape index: {}]
  %s16 = inlined_call_operand.<no memory space> [shape: f32[1,1], index: 16, kind: input, shape index: {}]
  %s17 = inlined_call_operand.vmem [shape: f32[8,8], index: 17, kind: output, shape index: {}]
  %s18 = sld [smem:[#allocation0]]
  $region78: #{qnet_forward.1} parent=0
    _
  %s20 = ssub.s32 1, %s18
  %s21 = scalar_select 0, %s20, %s18
  %v22 = vstv %s11
  %23 = vst [vmem:[#allocation6] sm:$0x1] %v22
  %v24 = vstv %s16
  %25 = vst [vmem:[#allocation7] sm:$0x1] %v24
  // Predicated region
  $region2: #{qnet_forward.1} parent=0 // pred_check
    _
  $region3: #{qnet_forward.1} parent=0 // pred_check_branch
    %27 = sbr.rel (0) target = $region5
  $region4: #{qnet_forward.1} parent=0 // pred_region
    _
  $region5: #{qnet_forward.1} parent=0 // pred_fallthru
    _
  // Predicated region
  $region6: #{qnet_forward.1} parent=0 // pred_check
    _
  $region7: #{qnet_forward.1} parent=0 // pred_check_branch
    %29 = sbr.rel (0) target = $region9
  $region8: #{qnet_forward.1} parent=0 // pred_region
    _
  $region9: #{qnet_forward.1} parent=0 // pred_fallthru
    _
  // Predicated region
  $region10: #{qnet_forward.1} parent=0 // pred_check
    _
  $region11: #{qnet_forward.1} parent=0 // pred_check_branch
    %31 = sbr.rel (0) target = $region13
  $region12: #{qnet_forward.1} parent=0 // pred_region
    _
  $region13: #{qnet_forward.1} parent=0 // pred_fallthru
    _
  // Predicated region
  $region14: #{qnet_forward.1} parent=0 // pred_check
    _
  $region15: #{qnet_forward.1} parent=0 // pred_check_branch
    %33 = sbr.rel (0) target = $region17
  $region16: #{qnet_forward.1} parent=0 // pred_region
    _
  $region17: #{qnet_forward.1} parent=0 // pred_fallthru
    _
  // Predicated region
  $region18: #{qnet_forward.1} parent=0 // pred_check
    _
  $region19: #{qnet_forward.1} parent=0 // pred_check_branch
    %35 = sbr.rel (0) target = $region21
  $region20: #{qnet_forward.1} parent=0 // pred_region
    _
  $region21: #{qnet_forward.1} parent=0 // pred_fallthru
    _
  // Predicated region
  $region22: #{qnet_forward.1} parent=0 // pred_check
    _
  $region23: #{qnet_forward.1} parent=0 // pred_check_branch
    %37 = sbr.rel (0) target = $region25
  $region24: #{qnet_forward.1} parent=0 // pred_region
    _
  $region25: #{qnet_forward.1} parent=0 // pred_fallthru
    _
  // Predicated region
  $region26: #{qnet_forward.1} parent=0 // pred_check
    _
  $region27: #{qnet_forward.1} parent=0 // pred_check_branch
    %39 = sbr.rel (0) target = $region29
  $region28: #{qnet_forward.1} parent=0 // pred_region
    _
  $region29: #{qnet_forward.1} parent=0 // pred_fallthru
    _
  // Predicated region
  $region30: #{qnet_forward.1} parent=0 // pred_check
    _
  $region31: #{qnet_forward.1} parent=0 // pred_check_branch
    %41 = sbr.rel (0) target = $region33
  $region32: #{qnet_forward.1} parent=0 // pred_region
    _
  $region33: #{qnet_forward.1} parent=0 // pred_fallthru
    _
  // Predicated region
  $region34: #{qnet_forward.1} parent=0 // pred_check
    _
  $region35: #{qnet_forward.1} parent=0 // pred_check_branch
    %43 = sbr.rel (0) target = $region37
  $region36: #{qnet_forward.1} parent=0 // pred_region
    _
  $region37: #{qnet_forward.1} parent=0 // pred_fallthru
    _
  // Predicated region
  $region38: #{qnet_forward.1} parent=0 // pred_check
    _
  $region39: #{qnet_forward.1} parent=0 // pred_check_branch
    %45 = sbr.rel (0) target = $region41
  $region40: #{qnet_forward.1} parent=0 // pred_region
    _
  $region41: #{qnet_forward.1} parent=0 // pred_fallthru
    _
  // Predicated region
  $region42: #{qnet_forward.1} parent=0 // pred_check
    _
  $region43: #{qnet_forward.1} parent=0 // pred_check_branch
    %47 = sbr.rel (0) target = $region45
  $region44: #{qnet_forward.1} parent=0 // pred_region
    _
  $region45: #{qnet_forward.1} parent=0 // pred_fallthru
    _
  // Predicated region
  $region46: #{qnet_forward.1} parent=0 // pred_check
    _
  $region47: #{qnet_forward.1} parent=0 // pred_check_branch
    %49 = sbr.rel (0) target = $region49
  $region48: #{qnet_forward.1} parent=0 // pred_region
    _
  $region49: #{qnet_forward.1} parent=0 // pred_fallthru
    _
  // Predicated region
  $region50: #{qnet_forward.1} parent=0 // pred_check
    _
  $region51: #{qnet_forward.1} parent=0 // pred_check_branch
    %51 = sbr.rel (0) target = $region53
  $region52: #{qnet_forward.1} parent=0 // pred_region
    _
  $region53: #{qnet_forward.1} parent=0 // pred_fallthru
    _
  // Predicated region
  $region54: #{qnet_forward.1} parent=0 // pred_check
    _
  $region55: #{qnet_forward.1} parent=0 // pred_check_branch
    %53 = sbr.rel (0) target = $region57
  $region56: #{qnet_forward.1} parent=0 // pred_region
    _
  $region57: #{qnet_forward.1} parent=0 // pred_fallthru
    _
  // Predicated region
  $region58: #{qnet_forward.1} parent=0 // pred_check
    _
  $region59: #{qnet_forward.1} parent=0 // pred_check_branch
    %55 = sbr.rel (0) target = $region61
  $region60: #{qnet_forward.1} parent=0 // pred_region
    _
  $region61: #{qnet_forward.1} parent=0 // pred_fallthru
    _
  // Predicated region
  $region62: #{qnet_forward.1} parent=0 // pred_check
    _
  $region63: #{qnet_forward.1} parent=0 // pred_check_branch
    %57 = sbr.rel (0) target = $region65
  $region64: #{qnet_forward.1} parent=0 // pred_region
    _
  $region65: #{qnet_forward.1} parent=0 // pred_fallthru
    _
  // Predicated region
  $region66: #{qnet_forward.1} parent=0 // pred_check
    _
  $region67: #{qnet_forward.1} parent=0 // pred_check_branch
    %59 = sbr.rel (0) target = $region69
  $region68: #{qnet_forward.1} parent=0 // pred_region
    _
  $region69: #{qnet_forward.1} parent=0 // pred_fallthru
    _
  %v61 = vld [vmem:[%s0] sm:$0xf]
  %v62 = vld [vmem:[%s0 + $0x4] sm:$0xf]
  %v63 = vld [vmem:[%s0 + $0x8] sm:$0xf]
  %v64 = vld [vmem:[%s0 + $0xc] sm:$0xf]
  %v65 = vld [vmem:[%s0 + $0x10] sm:$0xf]
  %v66 = vld [vmem:[%s0 + $0x14] sm:$0xf]
  %v67 = vld [vmem:[%s0 + $0x18] sm:$0xf]
  %v68 = vld [vmem:[%s0 + $0x1c] sm:$0xf]
  %v69 = vld [vmem:[%s2] sm:$0xf]
  %v70 = vld [vmem:[%s2 + $0x4] sm:$0xf]
  %v71 = vld [vmem:[%s2 + $0x8] sm:$0xf]
  %v72 = vld [vmem:[%s2 + $0xc] sm:$0xf]
  %v73 = vld [vmem:[%s4] sm:$0x1]
  %v75 = vperm.slane %v73, 0
  %v85 = vunpack.c.l.b16 %v61
  %v86 = vunpack.c.l.b16 %v62
  %v87 = vunpack.c.l.b16 %v63
  %v88 = vunpack.c.l.b16 %v64
  %v89 = vunpack.c.l.b16 %v65
  %v90 = vunpack.c.l.b16 %v66
  %v91 = vunpack.c.l.b16 %v67
  %v92 = vunpack.c.l.b16 %v68
  %v93 = vpack.c.b16 %v86, %v85
  %v94 = vpack.c.b16 %v88, %v87
  %v95 = vpack.c.b16 %v90, %v89
  %v96 = vpack.c.b16 %v92, %v91
  %v101 = vunpack.c.l.b16 %v69
  %v102 = vunpack.c.l.b16 %v70
  %v103 = vunpack.c.l.b16 %v71
  %v104 = vunpack.c.l.b16 %v72
  %v105 = vpack.c.b16 %v102, %v101
  %v106 = vpack.c.b16 %v104, %v103
  %vm109 = vcmask 261120
  %v111 = vsel %vm109, %v93, 0
  %v114 = vsel %vm109, %v94, 0
  %v117 = vsel %vm109, %v95, 0
  %v120 = vsel %vm109, %v96, 0
  %122 = vmatpush.bf16.msra.mxu0 0
  %123 = vmatpush.bf16.msra.mxu0 0
  %124 = vmatpush.bf16.msra.mxu0 0
  %125 = vmatpush.bf16.msra.mxu0 0
  %126 = vmatpush.bf16.msra.mxu0 0
  %127 = vmatpush.bf16.msra.mxu0 0
  %128 = vmatpush.bf16.msra.mxu0 %v106
  %129 = vmatpush.bf16.msra.mxu0 %v105
  %130 = vmatmul.bf16.gmra.mxu0 %v111
  %v131 = vpop.f32.mrf.mxu0
  %v132 = vadd.f32 %v75, %v131
  %v133 = vpop.f32.mrf.mxu0
  %v134 = vadd.f32 %v75, %v133
  %135 = vmatmul.bf16.gmra.mxu0 %v114
  %v136 = vpop.f32.mrf.mxu0
  %v137 = vadd.f32 %v75, %v136
  %v138 = vpop.f32.mrf.mxu0
  %v139 = vadd.f32 %v75, %v138
  %140 = vmatmul.bf16.gmra.mxu0 %v117
  %v141 = vpop.f32.mrf.mxu0
  %v142 = vadd.f32 %v75, %v141
  %v143 = vpop.f32.mrf.mxu0
  %v144 = vadd.f32 %v75, %v143
  %145 = vmatmul.bf16.gmra.mxu0 %v120
  %v146 = vpop.f32.mrf.mxu0
  %v147 = vadd.f32 %v75, %v146
  %v148 = vpop.f32.mrf.mxu0
  %v149 = vadd.f32 %v75, %v148
  %150 = vdwg.mxu0
  %151 = vst.msk [vmem:[#allocation2] sm:$0xff] %vm109, %v132
  %152 = vst.msk [vmem:[#allocation2 + $0x8] sm:$0xff] %vm109, %v134
  %153 = vst.msk [vmem:[#allocation2 + $0x10] sm:$0xff] %vm109, %v137
  %154 = vst.msk [vmem:[#allocation2 + $0x18] sm:$0xff] %vm109, %v139
  %155 = vst.msk [vmem:[#allocation2 + $0x20] sm:$0xff] %vm109, %v142
  %156 = vst.msk [vmem:[#allocation2 + $0x28] sm:$0xff] %vm109, %v144
  %157 = vst.msk [vmem:[#allocation2 + $0x30] sm:$0xff] %vm109, %v147
  %158 = vst.msk [vmem:[#allocation2 + $0x38] sm:$0xff] %vm109, %v149
  %s159 = scalar_lea.vmem %s2, 16
  %v160 = vld [vmem:[%s159] sm:$0xf]
  %v161 = vld [vmem:[%s159 + $0x4] sm:$0xf]
  %v162 = vld [vmem:[%s159 + $0x8] sm:$0xf]
  %v163 = vld [vmem:[%s159 + $0xc] sm:$0xf]
  %s164 = scalar_lea.vmem %s4, 1
  %v165 = vld [vmem:[%s164] sm:$0x1]
  %v167 = vperm.slane %v165, 0
  %v173 = vunpack.c.l.b16 %v160
  %v174 = vunpack.c.l.b16 %v161
  %v175 = vunpack.c.l.b16 %v162
  %v176 = vunpack.c.l.b16 %v163
  %v177 = vpack.c.b16 %v174, %v173
  %v178 = vpack.c.b16 %v176, %v175
  %181 = vmatpush.bf16.msra.mxu0 0
  %182 = vmatpush.bf16.msra.mxu0 0
  %183 = vmatpush.bf16.msra.mxu0 0
  %184 = vmatpush.bf16.msra.mxu0 0
  %185 = vmatpush.bf16.msra.mxu0 0
  %186 = vmatpush.bf16.msra.mxu0 0
  %187 = vmatpush.bf16.msra.mxu0 %v178
  %188 = vmatpush.bf16.msra.mxu0 %v177
  %189 = vmatmul.bf16.gmra.mxu0 %v111
  %v190 = vpop.f32.mrf.mxu0
  %v191 = vadd.f32 %v167, %v190
  %v192 = vpop.f32.mrf.mxu0
  %v193 = vadd.f32 %v167, %v192
  %194 = vmatmul.bf16.gmra.mxu0 %v114
  %v195 = vpop.f32.mrf.mxu0
  %v196 = vadd.f32 %v167, %v195
  %v197 = vpop.f32.mrf.mxu0
  %v198 = vadd.f32 %v167, %v197
  %199 = vmatmul.bf16.gmra.mxu0 %v117
  %v200 = vpop.f32.mrf.mxu0
  %v201 = vadd.f32 %v167, %v200
  %v202 = vpop.f32.mrf.mxu0
  %v203 = vadd.f32 %v167, %v202
  %204 = vmatmul.bf16.gmra.mxu0 %v120
  %v205 = vpop.f32.mrf.mxu0
  %v206 = vadd.f32 %v167, %v205
  %v207 = vpop.f32.mrf.mxu0
  %v208 = vadd.f32 %v167, %v207
  %209 = vdwg.mxu0
  %210 = vst.msk [vmem:[#allocation3] sm:$0xff] %vm109, %v191
  %211 = vst.msk [vmem:[#allocation3 + $0x8] sm:$0xff] %vm109, %v193
  %212 = vst.msk [vmem:[#allocation3 + $0x10] sm:$0xff] %vm109, %v196
  %213 = vst.msk [vmem:[#allocation3 + $0x18] sm:$0xff] %vm109, %v198
  %214 = vst.msk [vmem:[#allocation3 + $0x20] sm:$0xff] %vm109, %v201
  %215 = vst.msk [vmem:[#allocation3 + $0x28] sm:$0xff] %vm109, %v203
  %216 = vst.msk [vmem:[#allocation3 + $0x30] sm:$0xff] %vm109, %v206
  %217 = vst.msk [vmem:[#allocation3 + $0x38] sm:$0xff] %vm109, %v208
  %s218 = scalar_lea.vmem %s2, 32
  %v219 = vld [vmem:[%s218] sm:$0xf]
  %v220 = vld [vmem:[%s218 + $0x4] sm:$0xf]
  %v221 = vld [vmem:[%s218 + $0x8] sm:$0xf]
  %v222 = vld [vmem:[%s218 + $0xc] sm:$0xf]
  %s223 = scalar_lea.vmem %s4, 2
  %v224 = vld [vmem:[%s223] sm:$0x1]
  %v226 = vperm.slane %v224, 0
  %v232 = vunpack.c.l.b16 %v219
  %v233 = vunpack.c.l.b16 %v220
  %v234 = vunpack.c.l.b16 %v221
  %v235 = vunpack.c.l.b16 %v222
  %v236 = vpack.c.b16 %v233, %v232
  %v237 = vpack.c.b16 %v235, %v234
  %240 = vmatpush.bf16.msra.mxu0 0
  %241 = vmatpush.bf16.msra.mxu0 0
  %242 = vmatpush.bf16.msra.mxu0 0
  %243 = vmatpush.bf16.msra.mxu0 0
  %244 = vmatpush.bf16.msra.mxu0 0
  %245 = vmatpush.bf16.msra.mxu0 0
  %246 = vmatpush.bf16.msra.mxu0 %v237
  %247 = vmatpush.bf16.msra.mxu0 %v236
  %248 = vmatmul.bf16.gmra.mxu0 %v111
  %v249 = vpop.f32.mrf.mxu0
  %v250 = vadd.f32 %v226, %v249
  %v251 = vpop.f32.mrf.mxu0
  %v252 = vadd.f32 %v226, %v251
  %253 = vmatmul.bf16.gmra.mxu0 %v114
  %v254 = vpop.f32.mrf.mxu0
  %v255 = vadd.f32 %v226, %v254
  %v256 = vpop.f32.mrf.mxu0
  %v257 = vadd.f32 %v226, %v256
  %258 = vmatmul.bf16.gmra.mxu0 %v117
  %v259 = vpop.f32.mrf.mxu0
  %v260 = vadd.f32 %v226, %v259
  %v261 = vpop.f32.mrf.mxu0
  %v262 = vadd.f32 %v226, %v261
  %263 = vmatmul.bf16.gmra.mxu0 %v120
  %v264 = vpop.f32.mrf.mxu0
  %v265 = vadd.f32 %v226, %v264
  %v266 = vpop.f32.mrf.mxu0
  %v267 = vadd.f32 %v226, %v266
  %268 = vdwg.mxu0
  %269 = vst.msk [vmem:[#allocation4] sm:$0xff] %vm109, %v250
  %270 = vst.msk [vmem:[#allocation4 + $0x8] sm:$0xff] %vm109, %v252
  %271 = vst.msk [vmem:[#allocation4 + $0x10] sm:$0xff] %vm109, %v255
  %272 = vst.msk [vmem:[#allocation4 + $0x18] sm:$0xff] %vm109, %v257
  %273 = vst.msk [vmem:[#allocation4 + $0x20] sm:$0xff] %vm109, %v260
  %274 = vst.msk [vmem:[#allocation4 + $0x28] sm:$0xff] %vm109, %v262
  %275 = vst.msk [vmem:[#allocation4 + $0x30] sm:$0xff] %vm109, %v265
  %276 = vst.msk [vmem:[#allocation4 + $0x38] sm:$0xff] %vm109, %v267
  %277 = vst.msk [vmem:[#allocation5] sm:$0xff] %vm109, 0.0
  %v278 = vld [vmem:[#allocation5] sm:$0xff]
  %v279 = vpack.c.bf16 %v278, %v278
  %v280 = vld [vmem:[%s3] sm:$0xf]
  %v281 = vld [vmem:[%s3 + $0x4] sm:$0xf]
  %v282 = vld [vmem:[%s3 + $0x8] sm:$0xf]
  %v283 = vld [vmem:[%s3 + $0xc] sm:$0xf]
  %v288 = vunpack.c.l.b16 %v280
  %v289 = vunpack.c.l.b16 %v281
  %v290 = vunpack.c.l.b16 %v282
  %v291 = vunpack.c.l.b16 %v283
  %v292 = vpack.c.b16 %v289, %v288
  %v293 = vpack.c.b16 %v291, %v290
  %v297 = vsel %vm109, %v279, 0
  %299 = vmatpush.bf16.msra.mxu0 0
  %300 = vmatpush.bf16.msra.mxu0 0
  %301 = vmatpush.bf16.msra.mxu0 0
  %302 = vmatpush.bf16.msra.mxu0 0
  %303 = vmatpush.bf16.msra.mxu0 0
  %304 = vmatpush.bf16.msra.mxu0 0
  %305 = vmatpush.bf16.msra.mxu0 %v293
  %306 = vmatpush.bf16.msra.mxu0 %v292
  %307 = vmatmul.bf16.gmra.mxu0 %v297
  %v308 = vpop.f32.mrf.mxu0
  %v309 = vadd.f32 0.0, %v308
  %v310 = vpop.f32.mrf.mxu0
  %311 = vdwg.mxu0
  %s312 = scalar_lea.vmem %s3, 16
  %v313 = vld [vmem:[%s312] sm:$0xf]
  %v314 = vld [vmem:[%s312 + $0x4] sm:$0xf]
  %v315 = vld [vmem:[%s312 + $0x8] sm:$0xf]
  %v316 = vld [vmem:[%s312 + $0xc] sm:$0xf]
  %v321 = vunpack.c.l.b16 %v313
  %v322 = vunpack.c.l.b16 %v314
  %v323 = vunpack.c.l.b16 %v315
  %v324 = vunpack.c.l.b16 %v316
  %v325 = vpack.c.b16 %v322, %v321
  %v326 = vpack.c.b16 %v324, %v323
  %329 = vmatpush.bf16.msra.mxu0 0
  %330 = vmatpush.bf16.msra.mxu0 0
  %331 = vmatpush.bf16.msra.mxu0 0
  %332 = vmatpush.bf16.msra.mxu0 0
  %333 = vmatpush.bf16.msra.mxu0 0
  %334 = vmatpush.bf16.msra.mxu0 0
  %335 = vmatpush.bf16.msra.mxu0 %v326
  %336 = vmatpush.bf16.msra.mxu0 %v325
  %337 = vmatmul.bf16.gmra.mxu0 %v297
  %v338 = vpop.f32.mrf.mxu0
  %v339 = vadd.f32 0.0, %v338
  %v340 = vpop.f32.mrf.mxu0
  %341 = vdwg.mxu0
  %s342 = scalar_lea.vmem %s3, 32
  %v343 = vld [vmem:[%s342] sm:$0xf]
  %v344 = vld [vmem:[%s342 + $0x4] sm:$0xf]
  %v345 = vld [vmem:[%s342 + $0x8] sm:$0xf]
  %v346 = vld [vmem:[%s342 + $0xc] sm:$0xf]
  %v347 = vld [vmem:[%s5] sm:$0x1]
  %v349 = vperm.slane %v347, 0
  %v355 = vunpack.c.l.b16 %v343
  %v356 = vunpack.c.l.b16 %v344
  %v357 = vunpack.c.l.b16 %v345
  %v358 = vunpack.c.l.b16 %v346
  %v359 = vpack.c.b16 %v356, %v355
  %v360 = vpack.c.b16 %v358, %v357
  %363 = vmatpush.bf16.msra.mxu0 0
  %364 = vmatpush.bf16.msra.mxu0 0
  %365 = vmatpush.bf16.msra.mxu0 0
  %366 = vmatpush.bf16.msra.mxu0 0
  %367 = vmatpush.bf16.msra.mxu0 0
  %368 = vmatpush.bf16.msra.mxu0 0
  %369 = vmatpush.bf16.msra.mxu0 %v360
  %370 = vmatpush.bf16.msra.mxu0 %v359
  %371 = vmatmul.bf16.gmra.mxu0 %v297
  %v372 = vpop.f32.mrf.mxu0
  %v373 = vadd.f32 %v349, %v372
  %v374 = vpop.f32.mrf.mxu0
  %375 = vdwg.mxu0
  %v376 = vld [vmem:[#allocation2] sm:$0xff]
  %v377 = vadd.f32 %v376, %v309
  %v378 = vxor.u32 %v377, 2147483648
  %v379 = vmul.f32 %v378, 1.442695
  %v380 = vpow.pop %v379
  %v381 = vadd.f32 %v380, 1.0
  %v382 = vrcp.pop %v381
  %v383 = vmul.f32 %v381, %v382
  %v384 = vsub.f32 1.0, %v383
  %v385 = vmul.f32 %v382, %v384
  %v386 = vadd.f32 %v382, %v385
  %vm387 = vweird.f32 %v381
  %vm388 = vweird.f32 %v382
  %vm389 = vmor %vm387, %vm388
  %v390 = vsel %vm389, %v382, %v386
  %v391 = vand.u32 2147483647, %v381
  %vm392 = vcmp.eq.f32.partialorder %v391, 8.507059e+37
  %v393 = vand.u32 %v381, 2147483648
  %v394 = vor.u32 1.1754944e-38, %v393
  %v395 = vsel %vm392, %v394, %v390
  %v396 = vmul.f32 1.0, %v395
  %v397 = vld [vmem:[#allocation3] sm:$0xff]
  %v398 = vadd.f32 %v397, %v339
  %v399 = vxor.u32 %v398, 2147483648
  %v400 = vmul.f32 %v399, 1.442695
  %v401 = vpow.pop %v400
  %v402 = vadd.f32 %v401, 1.0
  %v403 = vrcp.pop %v402
  %v404 = vmul.f32 %v402, %v403
  %v405 = vsub.f32 1.0, %v404
  %v406 = vmul.f32 %v403, %v405
  %v407 = vadd.f32 %v403, %v406
  %vm408 = vweird.f32 %v402
  %vm409 = vweird.f32 %v403
  %vm410 = vmor %vm408, %vm409
  %v411 = vsel %vm410, %v403, %v407
  %v412 = vand.u32 2147483647, %v402
  %vm413 = vcmp.eq.f32.partialorder %v412, 8.507059e+37
  %v414 = vand.u32 %v402, 2147483648
  %v415 = vor.u32 1.1754944e-38, %v414
  %v416 = vsel %vm413, %v415, %v411
  %v417 = vmul.f32 1.0, %v416
  %v418 = vld [vmem:[#allocation4] sm:$0xff]
  %v419 = vmul.f32 %v396, %v373
  %v420 = vadd.f32 %v418, %v419
  %v421 = vtanh.pop %v420
  %v422 = vsub.f32 1.0, %v417
  %v423 = vmul.f32 %v422, %v421
  %v424 = vmul.f32 %v417, %v278
  %v425 = vadd.f32 %v423, %v424
  %426 = vst.msk [vmem:[#allocation5] sm:$0xff] %vm109, %v425
  %v427 = vld [vmem:[#allocation5] sm:$0xff]
  %v428 = vpack.c.bf16 %v427, %v427
  %v429 = vld [vmem:[%s3] sm:$0xf]
  %v430 = vld [vmem:[%s3 + $0x4] sm:$0xf]
  %v431 = vld [vmem:[%s3 + $0x8] sm:$0xf]
  %v432 = vld [vmem:[%s3 + $0xc] sm:$0xf]
  %v437 = vunpack.c.l.b16 %v429
  %v438 = vunpack.c.l.b16 %v430
  %v439 = vunpack.c.l.b16 %v431
  %v440 = vunpack.c.l.b16 %v432
  %v441 = vpack.c.b16 %v438, %v437
  %v442 = vpack.c.b16 %v440, %v439
  %v446 = vsel %vm109, %v428, 0
  %448 = vmatpush.bf16.msra.mxu0 0
  %449 = vmatpush.bf16.msra.mxu0 0
  %450 = vmatpush.bf16.msra.mxu0 0
  %451 = vmatpush.bf16.msra.mxu0 0
  %452 = vmatpush.bf16.msra.mxu0 0
  %453 = vmatpush.bf16.msra.mxu0 0
  %454 = vmatpush.bf16.msra.mxu0 %v442
  %455 = vmatpush.bf16.msra.mxu0 %v441
  %456 = vmatmul.bf16.gmra.mxu0 %v446
  %v457 = vpop.f32.mrf.mxu0
  %v458 = vadd.f32 0.0, %v457
  %v459 = vpop.f32.mrf.mxu0
  %460 = vdwg.mxu0
  %v461 = vld [vmem:[%s312] sm:$0xf]
  %v462 = vld [vmem:[%s312 + $0x4] sm:$0xf]
  %v463 = vld [vmem:[%s312 + $0x8] sm:$0xf]
  %v464 = vld [vmem:[%s312 + $0xc] sm:$0xf]
  %v469 = vunpack.c.l.b16 %v461
  %v470 = vunpack.c.l.b16 %v462
  %v471 = vunpack.c.l.b16 %v463
  %v472 = vunpack.c.l.b16 %v464
  %v473 = vpack.c.b16 %v470, %v469
  %v474 = vpack.c.b16 %v472, %v471
  %477 = vmatpush.bf16.msra.mxu0 0
  %478 = vmatpush.bf16.msra.mxu0 0
  %479 = vmatpush.bf16.msra.mxu0 0
  %480 = vmatpush.bf16.msra.mxu0 0
  %481 = vmatpush.bf16.msra.mxu0 0
  %482 = vmatpush.bf16.msra.mxu0 0
  %483 = vmatpush.bf16.msra.mxu0 %v474
  %484 = vmatpush.bf16.msra.mxu0 %v473
  %485 = vmatmul.bf16.gmra.mxu0 %v446
  %v486 = vpop.f32.mrf.mxu0
  %v487 = vadd.f32 0.0, %v486
  %v488 = vpop.f32.mrf.mxu0
  %489 = vdwg.mxu0
  %v490 = vld [vmem:[%s342] sm:$0xf]
  %v491 = vld [vmem:[%s342 + $0x4] sm:$0xf]
  %v492 = vld [vmem:[%s342 + $0x8] sm:$0xf]
  %v493 = vld [vmem:[%s342 + $0xc] sm:$0xf]
  %v494 = vld [vmem:[%s5] sm:$0x1]
  %v496 = vperm.slane %v494, 0
  %v502 = vunpack.c.l.b16 %v490
  %v503 = vunpack.c.l.b16 %v491
  %v504 = vunpack.c.l.b16 %v492
  %v505 = vunpack.c.l.b16 %v493
  %v506 = vpack.c.b16 %v503, %v502
  %v507 = vpack.c.b16 %v505, %v504
  %510 = vmatpush.bf16.msra.mxu0 0
  %511 = vmatpush.bf16.msra.mxu0 0
  %512 = vmatpush.bf16.msra.mxu0 0
  %513 = vmatpush.bf16.msra.mxu0 0
  %514 = vmatpush.bf16.msra.mxu0 0
  %515 = vmatpush.bf16.msra.mxu0 0
  %516 = vmatpush.bf16.msra.mxu0 %v507
  %517 = vmatpush.bf16.msra.mxu0 %v506
  %518 = vmatmul.bf16.gmra.mxu0 %v446
  %v519 = vpop.f32.mrf.mxu0
  %v520 = vadd.f32 %v496, %v519
  %v521 = vpop.f32.mrf.mxu0
  %522 = vdwg.mxu0
  %s523 = scalar_lea.vmem [#allocation2], 8
  %v524 = vld [vmem:[%s523] sm:$0xff]
  %v525 = vadd.f32 %v524, %v458
  %v526 = vxor.u32 %v525, 2147483648
  %v527 = vmul.f32 %v526, 1.442695
  %v528 = vpow.pop %v527
  %v529 = vadd.f32 %v528, 1.0
  %v530 = vrcp.pop %v529
  %v531 = vmul.f32 %v529, %v530
  %v532 = vsub.f32 1.0, %v531
  %v533 = vmul.f32 %v530, %v532
  %v534 = vadd.f32 %v530, %v533
  %vm535 = vweird.f32 %v529
  %vm536 = vweird.f32 %v530
  %vm537 = vmor %vm535, %vm536
  %v538 = vsel %vm537, %v530, %v534
  %v539 = vand.u32 2147483647, %v529
  %vm540 = vcmp.eq.f32.partialorder %v539, 8.507059e+37
  %v541 = vand.u32 %v529, 2147483648
  %v542 = vor.u32 1.1754944e-38, %v541
  %v543 = vsel %vm540, %v542, %v538
  %v544 = vmul.f32 1.0, %v543
  %s545 = scalar_lea.vmem [#allocation3], 8
  %v546 = vld [vmem:[%s545] sm:$0xff]
  %v547 = vadd.f32 %v546, %v487
  %v548 = vxor.u32 %v547, 2147483648
  %v549 = vmul.f32 %v548, 1.442695
  %v550 = vpow.pop %v549
  %v551 = vadd.f32 %v550, 1.0
  %v552 = vrcp.pop %v551
  %v553 = vmul.f32 %v551, %v552
  %v554 = vsub.f32 1.0, %v553
  %v555 = vmul.f32 %v552, %v554
  %v556 = vadd.f32 %v552, %v555
  %vm557 = vweird.f32 %v551
  %vm558 = vweird.f32 %v552
  %vm559 = vmor %vm557, %vm558
  %v560 = vsel %vm559, %v552, %v556
  %v561 = vand.u32 2147483647, %v551
  %vm562 = vcmp.eq.f32.partialorder %v561, 8.507059e+37
  %v563 = vand.u32 %v551, 2147483648
  %v564 = vor.u32 1.1754944e-38, %v563
  %v565 = vsel %vm562, %v564, %v560
  %v566 = vmul.f32 1.0, %v565
  %s567 = scalar_lea.vmem [#allocation4], 8
  %v568 = vld [vmem:[%s567] sm:$0xff]
  %v569 = vmul.f32 %v544, %v520
  %v570 = vadd.f32 %v568, %v569
  %v571 = vtanh.pop %v570
  %v572 = vsub.f32 1.0, %v566
  %v573 = vmul.f32 %v572, %v571
  %v574 = vmul.f32 %v566, %v427
  %v575 = vadd.f32 %v573, %v574
  %576 = vst.msk [vmem:[#allocation5] sm:$0xff] %vm109, %v575
  %v577 = vld [vmem:[#allocation5] sm:$0xff]
  %v578 = vpack.c.bf16 %v577, %v577
  %v579 = vld [vmem:[%s3] sm:$0xf]
  %v580 = vld [vmem:[%s3 + $0x4] sm:$0xf]
  %v581 = vld [vmem:[%s3 + $0x8] sm:$0xf]
  %v582 = vld [vmem:[%s3 + $0xc] sm:$0xf]
  %v587 = vunpack.c.l.b16 %v579
  %v588 = vunpack.c.l.b16 %v580
  %v589 = vunpack.c.l.b16 %v581
  %v590 = vunpack.c.l.b16 %v582
  %v591 = vpack.c.b16 %v588, %v587
  %v592 = vpack.c.b16 %v590, %v589
  %v596 = vsel %vm109, %v578, 0
  %598 = vmatpush.bf16.msra.mxu0 0
  %599 = vmatpush.bf16.msra.mxu0 0
  %600 = vmatpush.bf16.msra.mxu0 0
  %601 = vmatpush.bf16.msra.mxu0 0
  %602 = vmatpush.bf16.msra.mxu0 0
  %603 = vmatpush.bf16.msra.mxu0 0
  %604 = vmatpush.bf16.msra.mxu0 %v592
  %605 = vmatpush.bf16.msra.mxu0 %v591
  %606 = vmatmul.bf16.gmra.mxu0 %v596
  %v607 = vpop.f32.mrf.mxu0
  %v608 = vadd.f32 0.0, %v607
  %v609 = vpop.f32.mrf.mxu0
  %610 = vdwg.mxu0
  %v611 = vld [vmem:[%s312] sm:$0xf]
  %v612 = vld [vmem:[%s312 + $0x4] sm:$0xf]
  %v613 = vld [vmem:[%s312 + $0x8] sm:$0xf]
  %v614 = vld [vmem:[%s312 + $0xc] sm:$0xf]
  %v619 = vunpack.c.l.b16 %v611
  %v620 = vunpack.c.l.b16 %v612
  %v621 = vunpack.c.l.b16 %v613
  %v622 = vunpack.c.l.b16 %v614
  %v623 = vpack.c.b16 %v620, %v619
  %v624 = vpack.c.b16 %v622, %v621
  %627 = vmatpush.bf16.msra.mxu0 0
  %628 = vmatpush.bf16.msra.mxu0 0
  %629 = vmatpush.bf16.msra.mxu0 0
  %630 = vmatpush.bf16.msra.mxu0 0
  %631 = vmatpush.bf16.msra.mxu0 0
  %632 = vmatpush.bf16.msra.mxu0 0
  %633 = vmatpush.bf16.msra.mxu0 %v624
  %634 = vmatpush.bf16.msra.mxu0 %v623
  %635 = vmatmul.bf16.gmra.mxu0 %v596
  %v636 = vpop.f32.mrf.mxu0
  %v637 = vadd.f32 0.0, %v636
  %v638 = vpop.f32.mrf.mxu0
  %639 = vdwg.mxu0
  %v640 = vld [vmem:[%s342] sm:$0xf]
  %v641 = vld [vmem:[%s342 + $0x4] sm:$0xf]
  %v642 = vld [vmem:[%s342 + $0x8] sm:$0xf]
  %v643 = vld [vmem:[%s342 + $0xc] sm:$0xf]
  %v644 = vld [vmem:[%s5] sm:$0x1]
  %v646 = vperm.slane %v644, 0
  %v652 = vunpack.c.l.b16 %v640
  %v653 = vunpack.c.l.b16 %v641
  %v654 = vunpack.c.l.b16 %v642
  %v655 = vunpack.c.l.b16 %v643
  %v656 = vpack.c.b16 %v653, %v652
  %v657 = vpack.c.b16 %v655, %v654
  %660 = vmatpush.bf16.msra.mxu0 0
  %661 = vmatpush.bf16.msra.mxu0 0
  %662 = vmatpush.bf16.msra.mxu0 0
  %663 = vmatpush.bf16.msra.mxu0 0
  %664 = vmatpush.bf16.msra.mxu0 0
  %665 = vmatpush.bf16.msra.mxu0 0
  %666 = vmatpush.bf16.msra.mxu0 %v657
  %667 = vmatpush.bf16.msra.mxu0 %v656
  %668 = vmatmul.bf16.gmra.mxu0 %v596
  %v669 = vpop.f32.mrf.mxu0
  %v670 = vadd.f32 %v646, %v669
  %v671 = vpop.f32.mrf.mxu0
  %672 = vdwg.mxu0
  %s673 = scalar_lea.vmem [#allocation2], 16
  %v674 = vld [vmem:[%s673] sm:$0xff]
  %v675 = vadd.f32 %v674, %v608
  %v676 = vxor.u32 %v675, 2147483648
  %v677 = vmul.f32 %v676, 1.442695
  %v678 = vpow.pop %v677
  %v679 = vadd.f32 %v678, 1.0
  %v680 = vrcp.pop %v679
  %v681 = vmul.f32 %v679, %v680
  %v682 = vsub.f32 1.0, %v681
  %v683 = vmul.f32 %v680, %v682
  %v684 = vadd.f32 %v680, %v683
  %vm685 = vweird.f32 %v679
  %vm686 = vweird.f32 %v680
  %vm687 = vmor %vm685, %vm686
  %v688 = vsel %vm687, %v680, %v684
  %v689 = vand.u32 2147483647, %v679
  %vm690 = vcmp.eq.f32.partialorder %v689, 8.507059e+37
  %v691 = vand.u32 %v679, 2147483648
  %v692 = vor.u32 1.1754944e-38, %v691
  %v693 = vsel %vm690, %v692, %v688
  %v694 = vmul.f32 1.0, %v693
  %s695 = scalar_lea.vmem [#allocation3], 16
  %v696 = vld [vmem:[%s695] sm:$0xff]
  %v697 = vadd.f32 %v696, %v637
  %v698 = vxor.u32 %v697, 2147483648
  %v699 = vmul.f32 %v698, 1.442695
  %v700 = vpow.pop %v699
  %v701 = vadd.f32 %v700, 1.0
  %v702 = vrcp.pop %v701
  %v703 = vmul.f32 %v701, %v702
  %v704 = vsub.f32 1.0, %v703
  %v705 = vmul.f32 %v702, %v704
  %v706 = vadd.f32 %v702, %v705
  %vm707 = vweird.f32 %v701
  %vm708 = vweird.f32 %v702
  %vm709 = vmor %vm707, %vm708
  %v710 = vsel %vm709, %v702, %v706
  %v711 = vand.u32 2147483647, %v701
  %vm712 = vcmp.eq.f32.partialorder %v711, 8.507059e+37
  %v713 = vand.u32 %v701, 2147483648
  %v714 = vor.u32 1.1754944e-38, %v713
  %v715 = vsel %vm712, %v714, %v710
  %v716 = vmul.f32 1.0, %v715
  %s717 = scalar_lea.vmem [#allocation4], 16
  %v718 = vld [vmem:[%s717] sm:$0xff]
  %v719 = vmul.f32 %v694, %v670
  %v720 = vadd.f32 %v718, %v719
  %v721 = vtanh.pop %v720
  %v722 = vsub.f32 1.0, %v716
  %v723 = vmul.f32 %v722, %v721
  %v724 = vmul.f32 %v716, %v577
  %v725 = vadd.f32 %v723, %v724
  %726 = vst.msk [vmem:[#allocation5] sm:$0xff] %vm109, %v725
  %v727 = vld [vmem:[#allocation5] sm:$0xff]
  %v728 = vpack.c.bf16 %v727, %v727
  %v729 = vld [vmem:[%s3] sm:$0xf]
  %v730 = vld [vmem:[%s3 + $0x4] sm:$0xf]
  %v731 = vld [vmem:[%s3 + $0x8] sm:$0xf]
  %v732 = vld [vmem:[%s3 + $0xc] sm:$0xf]
  %v737 = vunpack.c.l.b16 %v729
  %v738 = vunpack.c.l.b16 %v730
  %v739 = vunpack.c.l.b16 %v731
  %v740 = vunpack.c.l.b16 %v732
  %v741 = vpack.c.b16 %v738, %v737
  %v742 = vpack.c.b16 %v740, %v739
  %v746 = vsel %vm109, %v728, 0
  %748 = vmatpush.bf16.msra.mxu0 0
  %749 = vmatpush.bf16.msra.mxu0 0
  %750 = vmatpush.bf16.msra.mxu0 0
  %751 = vmatpush.bf16.msra.mxu0 0
  %752 = vmatpush.bf16.msra.mxu0 0
  %753 = vmatpush.bf16.msra.mxu0 0
  %754 = vmatpush.bf16.msra.mxu0 %v742
  %755 = vmatpush.bf16.msra.mxu0 %v741
  %756 = vmatmul.bf16.gmra.mxu0 %v746
  %v757 = vpop.f32.mrf.mxu0
  %v758 = vadd.f32 0.0, %v757
  %v759 = vpop.f32.mrf.mxu0
  %760 = vdwg.mxu0
  %v761 = vld [vmem:[%s312] sm:$0xf]
  %v762 = vld [vmem:[%s312 + $0x4] sm:$0xf]
  %v763 = vld [vmem:[%s312 + $0x8] sm:$0xf]
  %v764 = vld [vmem:[%s312 + $0xc] sm:$0xf]
  %v769 = vunpack.c.l.b16 %v761
  %v770 = vunpack.c.l.b16 %v762
  %v771 = vunpack.c.l.b16 %v763
  %v772 = vunpack.c.l.b16 %v764
  %v773 = vpack.c.b16 %v770, %v769
  %v774 = vpack.c.b16 %v772, %v771
  %777 = vmatpush.bf16.msra.mxu0 0
  %778 = vmatpush.bf16.msra.mxu0 0
  %779 = vmatpush.bf16.msra.mxu0 0
  %780 = vmatpush.bf16.msra.mxu0 0
  %781 = vmatpush.bf16.msra.mxu0 0
  %782 = vmatpush.bf16.msra.mxu0 0
  %783 = vmatpush.bf16.msra.mxu0 %v774
  %784 = vmatpush.bf16.msra.mxu0 %v773
  %785 = vmatmul.bf16.gmra.mxu0 %v746
  %v786 = vpop.f32.mrf.mxu0
  %v787 = vadd.f32 0.0, %v786
  %v788 = vpop.f32.mrf.mxu0
  %789 = vdwg.mxu0
  %v790 = vld [vmem:[%s342] sm:$0xf]
  %v791 = vld [vmem:[%s342 + $0x4] sm:$0xf]
  %v792 = vld [vmem:[%s342 + $0x8] sm:$0xf]
  %v793 = vld [vmem:[%s342 + $0xc] sm:$0xf]
  %v794 = vld [vmem:[%s5] sm:$0x1]
  %v796 = vperm.slane %v794, 0
  %v802 = vunpack.c.l.b16 %v790
  %v803 = vunpack.c.l.b16 %v791
  %v804 = vunpack.c.l.b16 %v792
  %v805 = vunpack.c.l.b16 %v793
  %v806 = vpack.c.b16 %v803, %v802
  %v807 = vpack.c.b16 %v805, %v804
  %810 = vmatpush.bf16.msra.mxu0 0
  %811 = vmatpush.bf16.msra.mxu0 0
  %812 = vmatpush.bf16.msra.mxu0 0
  %813 = vmatpush.bf16.msra.mxu0 0
  %814 = vmatpush.bf16.msra.mxu0 0
  %815 = vmatpush.bf16.msra.mxu0 0
  %816 = vmatpush.bf16.msra.mxu0 %v807
  %817 = vmatpush.bf16.msra.mxu0 %v806
  %818 = vmatmul.bf16.gmra.mxu0 %v746
  %v819 = vpop.f32.mrf.mxu0
  %v820 = vadd.f32 %v796, %v819
  %v821 = vpop.f32.mrf.mxu0
  %822 = vdwg.mxu0
  %s823 = scalar_lea.vmem [#allocation2], 24
  %v824 = vld [vmem:[%s823] sm:$0xff]
  %v825 = vadd.f32 %v824, %v758
  %v826 = vxor.u32 %v825, 2147483648
  %v827 = vmul.f32 %v826, 1.442695
  %v828 = vpow.pop %v827
  %v829 = vadd.f32 %v828, 1.0
  %v830 = vrcp.pop %v829
  %v831 = vmul.f32 %v829, %v830
  %v832 = vsub.f32 1.0, %v831
  %v833 = vmul.f32 %v830, %v832
  %v834 = vadd.f32 %v830, %v833
  %vm835 = vweird.f32 %v829
  %vm836 = vweird.f32 %v830
  %vm837 = vmor %vm835, %vm836
  %v838 = vsel %vm837, %v830, %v834
  %v839 = vand.u32 2147483647, %v829
  %vm840 = vcmp.eq.f32.partialorder %v839, 8.507059e+37
  %v841 = vand.u32 %v829, 2147483648
  %v842 = vor.u32 1.1754944e-38, %v841
  %v843 = vsel %vm840, %v842, %v838
  %v844 = vmul.f32 1.0, %v843
  %s845 = scalar_lea.vmem [#allocation3], 24
  %v846 = vld [vmem:[%s845] sm:$0xff]
  %v847 = vadd.f32 %v846, %v787
  %v848 = vxor.u32 %v847, 2147483648
  %v849 = vmul.f32 %v848, 1.442695
  %v850 = vpow.pop %v849
  %v851 = vadd.f32 %v850, 1.0
  %v852 = vrcp.pop %v851
  %v853 = vmul.f32 %v851, %v852
  %v854 = vsub.f32 1.0, %v853
  %v855 = vmul.f32 %v852, %v854
  %v856 = vadd.f32 %v852, %v855
  %vm857 = vweird.f32 %v851
  %vm858 = vweird.f32 %v852
  %vm859 = vmor %vm857, %vm858
  %v860 = vsel %vm859, %v852, %v856
  %v861 = vand.u32 2147483647, %v851
  %vm862 = vcmp.eq.f32.partialorder %v861, 8.507059e+37
  %v863 = vand.u32 %v851, 2147483648
  %v864 = vor.u32 1.1754944e-38, %v863
  %v865 = vsel %vm862, %v864, %v860
  %v866 = vmul.f32 1.0, %v865
  %s867 = scalar_lea.vmem [#allocation4], 24
  %v868 = vld [vmem:[%s867] sm:$0xff]
  %v869 = vmul.f32 %v844, %v820
  %v870 = vadd.f32 %v868, %v869
  %v871 = vtanh.pop %v870
  %v872 = vsub.f32 1.0, %v866
  %v873 = vmul.f32 %v872, %v871
  %v874 = vmul.f32 %v866, %v727
  %v875 = vadd.f32 %v873, %v874
  %876 = vst.msk [vmem:[#allocation5] sm:$0xff] %vm109, %v875
  %v877 = vld [vmem:[#allocation5] sm:$0xff]
  %v878 = vpack.c.bf16 %v877, %v877
  %v879 = vld [vmem:[%s3] sm:$0xf]
  %v880 = vld [vmem:[%s3 + $0x4] sm:$0xf]
  %v881 = vld [vmem:[%s3 + $0x8] sm:$0xf]
  %v882 = vld [vmem:[%s3 + $0xc] sm:$0xf]
  %v887 = vunpack.c.l.b16 %v879
  %v888 = vunpack.c.l.b16 %v880
  %v889 = vunpack.c.l.b16 %v881
  %v890 = vunpack.c.l.b16 %v882
  %v891 = vpack.c.b16 %v888, %v887
  %v892 = vpack.c.b16 %v890, %v889
  %v896 = vsel %vm109, %v878, 0
  %898 = vmatpush.bf16.msra.mxu0 0
  %899 = vmatpush.bf16.msra.mxu0 0
  %900 = vmatpush.bf16.msra.mxu0 0
  %901 = vmatpush.bf16.msra.mxu0 0
  %902 = vmatpush.bf16.msra.mxu0 0
  %903 = vmatpush.bf16.msra.mxu0 0
  %904 = vmatpush.bf16.msra.mxu0 %v892
  %905 = vmatpush.bf16.msra.mxu0 %v891
  %906 = vmatmul.bf16.gmra.mxu0 %v896
  %v907 = vpop.f32.mrf.mxu0
  %v908 = vadd.f32 0.0, %v907
  %v909 = vpop.f32.mrf.mxu0
  %910 = vdwg.mxu0
  %v911 = vld [vmem:[%s312] sm:$0xf]
  %v912 = vld [vmem:[%s312 + $0x4] sm:$0xf]
  %v913 = vld [vmem:[%s312 + $0x8] sm:$0xf]
  %v914 = vld [vmem:[%s312 + $0xc] sm:$0xf]
  %v919 = vunpack.c.l.b16 %v911
  %v920 = vunpack.c.l.b16 %v912
  %v921 = vunpack.c.l.b16 %v913
  %v922 = vunpack.c.l.b16 %v914
  %v923 = vpack.c.b16 %v920, %v919
  %v924 = vpack.c.b16 %v922, %v921
  %927 = vmatpush.bf16.msra.mxu0 0
  %928 = vmatpush.bf16.msra.mxu0 0
  %929 = vmatpush.bf16.msra.mxu0 0
  %930 = vmatpush.bf16.msra.mxu0 0
  %931 = vmatpush.bf16.msra.mxu0 0
  %932 = vmatpush.bf16.msra.mxu0 0
  %933 = vmatpush.bf16.msra.mxu0 %v924
  %934 = vmatpush.bf16.msra.mxu0 %v923
  %935 = vmatmul.bf16.gmra.mxu0 %v896
  %v936 = vpop.f32.mrf.mxu0
  %v937 = vadd.f32 0.0, %v936
  %v938 = vpop.f32.mrf.mxu0
  %939 = vdwg.mxu0
  %v940 = vld [vmem:[%s342] sm:$0xf]
  %v941 = vld [vmem:[%s342 + $0x4] sm:$0xf]
  %v942 = vld [vmem:[%s342 + $0x8] sm:$0xf]
  %v943 = vld [vmem:[%s342 + $0xc] sm:$0xf]
  %v944 = vld [vmem:[%s5] sm:$0x1]
  %v946 = vperm.slane %v944, 0
  %v952 = vunpack.c.l.b16 %v940
  %v953 = vunpack.c.l.b16 %v941
  %v954 = vunpack.c.l.b16 %v942
  %v955 = vunpack.c.l.b16 %v943
  %v956 = vpack.c.b16 %v953, %v952
  %v957 = vpack.c.b16 %v955, %v954
  %960 = vmatpush.bf16.msra.mxu0 0
  %961 = vmatpush.bf16.msra.mxu0 0
  %962 = vmatpush.bf16.msra.mxu0 0
  %963 = vmatpush.bf16.msra.mxu0 0
  %964 = vmatpush.bf16.msra.mxu0 0
  %965 = vmatpush.bf16.msra.mxu0 0
  %966 = vmatpush.bf16.msra.mxu0 %v957
  %967 = vmatpush.bf16.msra.mxu0 %v956
  %968 = vmatmul.bf16.gmra.mxu0 %v896
  %v969 = vpop.f32.mrf.mxu0
  %v970 = vadd.f32 %v946, %v969
  %v971 = vpop.f32.mrf.mxu0
  %972 = vdwg.mxu0
  %s973 = scalar_lea.vmem [#allocation2], 32
  %v974 = vld [vmem:[%s973] sm:$0xff]
  %v975 = vadd.f32 %v974, %v908
  %v976 = vxor.u32 %v975, 2147483648
  %v977 = vmul.f32 %v976, 1.442695
  %v978 = vpow.pop %v977
  %v979 = vadd.f32 %v978, 1.0
  %v980 = vrcp.pop %v979
  %v981 = vmul.f32 %v979, %v980
  %v982 = vsub.f32 1.0, %v981
  %v983 = vmul.f32 %v980, %v982
  %v984 = vadd.f32 %v980, %v983
  %vm985 = vweird.f32 %v979
  %vm986 = vweird.f32 %v980
  %vm987 = vmor %vm985, %vm986
  %v988 = vsel %vm987, %v980, %v984
  %v989 = vand.u32 2147483647, %v979
  %vm990 = vcmp.eq.f32.partialorder %v989, 8.507059e+37
  %v991 = vand.u32 %v979, 2147483648
  %v992 = vor.u32 1.1754944e-38, %v991
  %v993 = vsel %vm990, %v992, %v988
  %v994 = vmul.f32 1.0, %v993
  %s995 = scalar_lea.vmem [#allocation3], 32
  %v996 = vld [vmem:[%s995] sm:$0xff]
  %v997 = vadd.f32 %v996, %v937
  %v998 = vxor.u32 %v997, 2147483648
  %v999 = vmul.f32 %v998, 1.442695
  %v1000 = vpow.pop %v999
  %v1001 = vadd.f32 %v1000, 1.0
  %v1002 = vrcp.pop %v1001
  %v1003 = vmul.f32 %v1001, %v1002
  %v1004 = vsub.f32 1.0, %v1003
  %v1005 = vmul.f32 %v1002, %v1004
  %v1006 = vadd.f32 %v1002, %v1005
  %vm1007 = vweird.f32 %v1001
  %vm1008 = vweird.f32 %v1002
  %vm1009 = vmor %vm1007, %vm1008
  %v1010 = vsel %vm1009, %v1002, %v1006
  %v1011 = vand.u32 2147483647, %v1001
  %vm1012 = vcmp.eq.f32.partialorder %v1011, 8.507059e+37
  %v1013 = vand.u32 %v1001, 2147483648
  %v1014 = vor.u32 1.1754944e-38, %v1013
  %v1015 = vsel %vm1012, %v1014, %v1010
  %v1016 = vmul.f32 1.0, %v1015
  %s1017 = scalar_lea.vmem [#allocation4], 32
  %v1018 = vld [vmem:[%s1017] sm:$0xff]
  %v1019 = vmul.f32 %v994, %v970
  %v1020 = vadd.f32 %v1018, %v1019
  %v1021 = vtanh.pop %v1020
  %v1022 = vsub.f32 1.0, %v1016
  %v1023 = vmul.f32 %v1022, %v1021
  %v1024 = vmul.f32 %v1016, %v877
  %v1025 = vadd.f32 %v1023, %v1024
  %1026 = vst.msk [vmem:[#allocation5] sm:$0xff] %vm109, %v1025
  %v1027 = vld [vmem:[#allocation5] sm:$0xff]
  %v1028 = vpack.c.bf16 %v1027, %v1027
  %v1029 = vld [vmem:[%s3] sm:$0xf]
  %v1030 = vld [vmem:[%s3 + $0x4] sm:$0xf]
  %v1031 = vld [vmem:[%s3 + $0x8] sm:$0xf]
  %v1032 = vld [vmem:[%s3 + $0xc] sm:$0xf]
  %v1037 = vunpack.c.l.b16 %v1029
  %v1038 = vunpack.c.l.b16 %v1030
  %v1039 = vunpack.c.l.b16 %v1031
  %v1040 = vunpack.c.l.b16 %v1032
  %v1041 = vpack.c.b16 %v1038, %v1037
  %v1042 = vpack.c.b16 %v1040, %v1039
  %v1046 = vsel %vm109, %v1028, 0
  %1048 = vmatpush.bf16.msra.mxu0 0
  %1049 = vmatpush.bf16.msra.mxu0 0
  %1050 = vmatpush.bf16.msra.mxu0 0
  %1051 = vmatpush.bf16.msra.mxu0 0
  %1052 = vmatpush.bf16.msra.mxu0 0
  %1053 = vmatpush.bf16.msra.mxu0 0
  %1054 = vmatpush.bf16.msra.mxu0 %v1042
  %1055 = vmatpush.bf16.msra.mxu0 %v1041
  %1056 = vmatmul.bf16.gmra.mxu0 %v1046
  %v1057 = vpop.f32.mrf.mxu0
  %v1058 = vadd.f32 0.0, %v1057
  %v1059 = vpop.f32.mrf.mxu0
  %1060 = vdwg.mxu0
  %v1061 = vld [vmem:[%s312] sm:$0xf]
  %v1062 = vld [vmem:[%s312 + $0x4] sm:$0xf]
  %v1063 = vld [vmem:[%s312 + $0x8] sm:$0xf]
  %v1064 = vld [vmem:[%s312 + $0xc] sm:$0xf]
  %v1069 = vunpack.c.l.b16 %v1061
  %v1070 = vunpack.c.l.b16 %v1062
  %v1071 = vunpack.c.l.b16 %v1063
  %v1072 = vunpack.c.l.b16 %v1064
  %v1073 = vpack.c.b16 %v1070, %v1069
  %v1074 = vpack.c.b16 %v1072, %v1071
  %1077 = vmatpush.bf16.msra.mxu0 0
  %1078 = vmatpush.bf16.msra.mxu0 0
  %1079 = vmatpush.bf16.msra.mxu0 0
  %1080 = vmatpush.bf16.msra.mxu0 0
  %1081 = vmatpush.bf16.msra.mxu0 0
  %1082 = vmatpush.bf16.msra.mxu0 0
  %1083 = vmatpush.bf16.msra.mxu0 %v1074
  %1084 = vmatpush.bf16.msra.mxu0 %v1073
  %1085 = vmatmul.bf16.gmra.mxu0 %v1046
  %v1086 = vpop.f32.mrf.mxu0
  %v1087 = vadd.f32 0.0, %v1086
  %v1088 = vpop.f32.mrf.mxu0
  %1089 = vdwg.mxu0
  %v1090 = vld [vmem:[%s342] sm:$0xf]
  %v1091 = vld [vmem:[%s342 + $0x4] sm:$0xf]
  %v1092 = vld [vmem:[%s342 + $0x8] sm:$0xf]
  %v1093 = vld [vmem:[%s342 + $0xc] sm:$0xf]
  %v1094 = vld [vmem:[%s5] sm:$0x1]
  %v1096 = vperm.slane %v1094, 0
  %v1102 = vunpack.c.l.b16 %v1090
  %v1103 = vunpack.c.l.b16 %v1091
  %v1104 = vunpack.c.l.b16 %v1092
  %v1105 = vunpack.c.l.b16 %v1093
  %v1106 = vpack.c.b16 %v1103, %v1102
  %v1107 = vpack.c.b16 %v1105, %v1104
  %1110 = vmatpush.bf16.msra.mxu0 0
  %1111 = vmatpush.bf16.msra.mxu0 0
  %1112 = vmatpush.bf16.msra.mxu0 0
  %1113 = vmatpush.bf16.msra.mxu0 0
  %1114 = vmatpush.bf16.msra.mxu0 0
  %1115 = vmatpush.bf16.msra.mxu0 0
  %1116 = vmatpush.bf16.msra.mxu0 %v1107
  %1117 = vmatpush.bf16.msra.mxu0 %v1106
  %1118 = vmatmul.bf16.gmra.mxu0 %v1046
  %v1119 = vpop.f32.mrf.mxu0
  %v1120 = vadd.f32 %v1096, %v1119
  %v1121 = vpop.f32.mrf.mxu0
  %1122 = vdwg.mxu0
  %s1123 = scalar_lea.vmem [#allocation2], 40
  %v1124 = vld [vmem:[%s1123] sm:$0xff]
  %v1125 = vadd.f32 %v1124, %v1058
  %v1126 = vxor.u32 %v1125, 2147483648
  %v1127 = vmul.f32 %v1126, 1.442695
  %v1128 = vpow.pop %v1127
  %v1129 = vadd.f32 %v1128, 1.0
  %v1130 = vrcp.pop %v1129
  %v1131 = vmul.f32 %v1129, %v1130
  %v1132 = vsub.f32 1.0, %v1131
  %v1133 = vmul.f32 %v1130, %v1132
  %v1134 = vadd.f32 %v1130, %v1133
  %vm1135 = vweird.f32 %v1129
  %vm1136 = vweird.f32 %v1130
  %vm1137 = vmor %vm1135, %vm1136
  %v1138 = vsel %vm1137, %v1130, %v1134
  %v1139 = vand.u32 2147483647, %v1129
  %vm1140 = vcmp.eq.f32.partialorder %v1139, 8.507059e+37
  %v1141 = vand.u32 %v1129, 2147483648
  %v1142 = vor.u32 1.1754944e-38, %v1141
  %v1143 = vsel %vm1140, %v1142, %v1138
  %v1144 = vmul.f32 1.0, %v1143
  %s1145 = scalar_lea.vmem [#allocation3], 40
  %v1146 = vld [vmem:[%s1145] sm:$0xff]
  %v1147 = vadd.f32 %v1146, %v1087
  %v1148 = vxor.u32 %v1147, 2147483648
  %v1149 = vmul.f32 %v1148, 1.442695
  %v1150 = vpow.pop %v1149
  %v1151 = vadd.f32 %v1150, 1.0
  %v1152 = vrcp.pop %v1151
  %v1153 = vmul.f32 %v1151, %v1152
  %v1154 = vsub.f32 1.0, %v1153
  %v1155 = vmul.f32 %v1152, %v1154
  %v1156 = vadd.f32 %v1152, %v1155
  %vm1157 = vweird.f32 %v1151
  %vm1158 = vweird.f32 %v1152
  %vm1159 = vmor %vm1157, %vm1158
  %v1160 = vsel %vm1159, %v1152, %v1156
  %v1161 = vand.u32 2147483647, %v1151
  %vm1162 = vcmp.eq.f32.partialorder %v1161, 8.507059e+37
  %v1163 = vand.u32 %v1151, 2147483648
  %v1164 = vor.u32 1.1754944e-38, %v1163
  %v1165 = vsel %vm1162, %v1164, %v1160
  %v1166 = vmul.f32 1.0, %v1165
  %s1167 = scalar_lea.vmem [#allocation4], 40
  %v1168 = vld [vmem:[%s1167] sm:$0xff]
  %v1169 = vmul.f32 %v1144, %v1120
  %v1170 = vadd.f32 %v1168, %v1169
  %v1171 = vtanh.pop %v1170
  %v1172 = vsub.f32 1.0, %v1166
  %v1173 = vmul.f32 %v1172, %v1171
  %v1174 = vmul.f32 %v1166, %v1027
  %v1175 = vadd.f32 %v1173, %v1174
  %1176 = vst.msk [vmem:[#allocation5] sm:$0xff] %vm109, %v1175
  %v1177 = vld [vmem:[#allocation5] sm:$0xff]
  %v1178 = vpack.c.bf16 %v1177, %v1177
  %v1179 = vld [vmem:[%s3] sm:$0xf]
  %v1180 = vld [vmem:[%s3 + $0x4] sm:$0xf]
  %v1181 = vld [vmem:[%s3 + $0x8] sm:$0xf]
  %v1182 = vld [vmem:[%s3 + $0xc] sm:$0xf]
  %v1187 = vunpack.c.l.b16 %v1179
  %v1188 = vunpack.c.l.b16 %v1180
  %v1189 = vunpack.c.l.b16 %v1181
  %v1190 = vunpack.c.l.b16 %v1182
  %v1191 = vpack.c.b16 %v1188, %v1187
  %v1192 = vpack.c.b16 %v1190, %v1189
  %v1196 = vsel %vm109, %v1178, 0
  %1198 = vmatpush.bf16.msra.mxu0 0
  %1199 = vmatpush.bf16.msra.mxu0 0
  %1200 = vmatpush.bf16.msra.mxu0 0
  %1201 = vmatpush.bf16.msra.mxu0 0
  %1202 = vmatpush.bf16.msra.mxu0 0
  %1203 = vmatpush.bf16.msra.mxu0 0
  %1204 = vmatpush.bf16.msra.mxu0 %v1192
  %1205 = vmatpush.bf16.msra.mxu0 %v1191
  %1206 = vmatmul.bf16.gmra.mxu0 %v1196
  %v1207 = vpop.f32.mrf.mxu0
  %v1208 = vadd.f32 0.0, %v1207
  %v1209 = vpop.f32.mrf.mxu0
  %1210 = vdwg.mxu0
  %v1211 = vld [vmem:[%s312] sm:$0xf]
  %v1212 = vld [vmem:[%s312 + $0x4] sm:$0xf]
  %v1213 = vld [vmem:[%s312 + $0x8] sm:$0xf]
  %v1214 = vld [vmem:[%s312 + $0xc] sm:$0xf]
  %v1219 = vunpack.c.l.b16 %v1211
  %v1220 = vunpack.c.l.b16 %v1212
  %v1221 = vunpack.c.l.b16 %v1213
  %v1222 = vunpack.c.l.b16 %v1214
  %v1223 = vpack.c.b16 %v1220, %v1219
  %v1224 = vpack.c.b16 %v1222, %v1221
  %1227 = vmatpush.bf16.msra.mxu0 0
  %1228 = vmatpush.bf16.msra.mxu0 0
  %1229 = vmatpush.bf16.msra.mxu0 0
  %1230 = vmatpush.bf16.msra.mxu0 0
  %1231 = vmatpush.bf16.msra.mxu0 0
  %1232 = vmatpush.bf16.msra.mxu0 0
  %1233 = vmatpush.bf16.msra.mxu0 %v1224
  %1234 = vmatpush.bf16.msra.mxu0 %v1223
  %1235 = vmatmul.bf16.gmra.mxu0 %v1196
  %v1236 = vpop.f32.mrf.mxu0
  %v1237 = vadd.f32 0.0, %v1236
  %v1238 = vpop.f32.mrf.mxu0
  %1239 = vdwg.mxu0
  %v1240 = vld [vmem:[%s342] sm:$0xf]
  %v1241 = vld [vmem:[%s342 + $0x4] sm:$0xf]
  %v1242 = vld [vmem:[%s342 + $0x8] sm:$0xf]
  %v1243 = vld [vmem:[%s342 + $0xc] sm:$0xf]
  %v1244 = vld [vmem:[%s5] sm:$0x1]
  %v1246 = vperm.slane %v1244, 0
  %v1252 = vunpack.c.l.b16 %v1240
  %v1253 = vunpack.c.l.b16 %v1241
  %v1254 = vunpack.c.l.b16 %v1242
  %v1255 = vunpack.c.l.b16 %v1243
  %v1256 = vpack.c.b16 %v1253, %v1252
  %v1257 = vpack.c.b16 %v1255, %v1254
  %1260 = vmatpush.bf16.msra.mxu0 0
  %1261 = vmatpush.bf16.msra.mxu0 0
  %1262 = vmatpush.bf16.msra.mxu0 0
  %1263 = vmatpush.bf16.msra.mxu0 0
  %1264 = vmatpush.bf16.msra.mxu0 0
  %1265 = vmatpush.bf16.msra.mxu0 0
  %1266 = vmatpush.bf16.msra.mxu0 %v1257
  %1267 = vmatpush.bf16.msra.mxu0 %v1256
  %1268 = vmatmul.bf16.gmra.mxu0 %v1196
  %v1269 = vpop.f32.mrf.mxu0
  %v1270 = vadd.f32 %v1246, %v1269
  %v1271 = vpop.f32.mrf.mxu0
  %1272 = vdwg.mxu0
  %s1273 = scalar_lea.vmem [#allocation2], 48
  %v1274 = vld [vmem:[%s1273] sm:$0xff]
  %v1275 = vadd.f32 %v1274, %v1208
  %v1276 = vxor.u32 %v1275, 2147483648
  %v1277 = vmul.f32 %v1276, 1.442695
  %v1278 = vpow.pop %v1277
  %v1279 = vadd.f32 %v1278, 1.0
  %v1280 = vrcp.pop %v1279
  %v1281 = vmul.f32 %v1279, %v1280
  %v1282 = vsub.f32 1.0, %v1281
  %v1283 = vmul.f32 %v1280, %v1282
  %v1284 = vadd.f32 %v1280, %v1283
  %vm1285 = vweird.f32 %v1279
  %vm1286 = vweird.f32 %v1280
  %vm1287 = vmor %vm1285, %vm1286
  %v1288 = vsel %vm1287, %v1280, %v1284
  %v1289 = vand.u32 2147483647, %v1279
  %vm1290 = vcmp.eq.f32.partialorder %v1289, 8.507059e+37
  %v1291 = vand.u32 %v1279, 2147483648
  %v1292 = vor.u32 1.1754944e-38, %v1291
  %v1293 = vsel %vm1290, %v1292, %v1288
  %v1294 = vmul.f32 1.0, %v1293
  %s1295 = scalar_lea.vmem [#allocation3], 48
  %v1296 = vld [vmem:[%s1295] sm:$0xff]
  %v1297 = vadd.f32 %v1296, %v1237
  %v1298 = vxor.u32 %v1297, 2147483648
  %v1299 = vmul.f32 %v1298, 1.442695
  %v1300 = vpow.pop %v1299
  %v1301 = vadd.f32 %v1300, 1.0
  %v1302 = vrcp.pop %v1301
  %v1303 = vmul.f32 %v1301, %v1302
  %v1304 = vsub.f32 1.0, %v1303
  %v1305 = vmul.f32 %v1302, %v1304
  %v1306 = vadd.f32 %v1302, %v1305
  %vm1307 = vweird.f32 %v1301
  %vm1308 = vweird.f32 %v1302
  %vm1309 = vmor %vm1307, %vm1308
  %v1310 = vsel %vm1309, %v1302, %v1306
  %v1311 = vand.u32 2147483647, %v1301
  %vm1312 = vcmp.eq.f32.partialorder %v1311, 8.507059e+37
  %v1313 = vand.u32 %v1301, 2147483648
  %v1314 = vor.u32 1.1754944e-38, %v1313
  %v1315 = vsel %vm1312, %v1314, %v1310
  %v1316 = vmul.f32 1.0, %v1315
  %s1317 = scalar_lea.vmem [#allocation4], 48
  %v1318 = vld [vmem:[%s1317] sm:$0xff]
  %v1319 = vmul.f32 %v1294, %v1270
  %v1320 = vadd.f32 %v1318, %v1319
  %v1321 = vtanh.pop %v1320
  %v1322 = vsub.f32 1.0, %v1316
  %v1323 = vmul.f32 %v1322, %v1321
  %v1324 = vmul.f32 %v1316, %v1177
  %v1325 = vadd.f32 %v1323, %v1324
  %1326 = vst.msk [vmem:[#allocation5] sm:$0xff] %vm109, %v1325
  %v1327 = vld [vmem:[#allocation5] sm:$0xff]
  %v1328 = vpack.c.bf16 %v1327, %v1327
  %v1329 = vld [vmem:[%s3] sm:$0xf]
  %v1330 = vld [vmem:[%s3 + $0x4] sm:$0xf]
  %v1331 = vld [vmem:[%s3 + $0x8] sm:$0xf]
  %v1332 = vld [vmem:[%s3 + $0xc] sm:$0xf]
  %v1337 = vunpack.c.l.b16 %v1329
  %v1338 = vunpack.c.l.b16 %v1330
  %v1339 = vunpack.c.l.b16 %v1331
  %v1340 = vunpack.c.l.b16 %v1332
  %v1341 = vpack.c.b16 %v1338, %v1337
  %v1342 = vpack.c.b16 %v1340, %v1339
  %v1346 = vsel %vm109, %v1328, 0
  %1348 = vmatpush.bf16.msra.mxu0 0
  %1349 = vmatpush.bf16.msra.mxu0 0
  %1350 = vmatpush.bf16.msra.mxu0 0
  %1351 = vmatpush.bf16.msra.mxu0 0
  %1352 = vmatpush.bf16.msra.mxu0 0
  %1353 = vmatpush.bf16.msra.mxu0 0
  %1354 = vmatpush.bf16.msra.mxu0 %v1342
  %1355 = vmatpush.bf16.msra.mxu0 %v1341
  %1356 = vmatmul.bf16.gmra.mxu0 %v1346
  %v1357 = vpop.f32.mrf.mxu0
  %v1358 = vadd.f32 0.0, %v1357
  %v1359 = vpop.f32.mrf.mxu0
  %1360 = vdwg.mxu0
  %v1361 = vld [vmem:[%s312] sm:$0xf]
  %v1362 = vld [vmem:[%s312 + $0x4] sm:$0xf]
  %v1363 = vld [vmem:[%s312 + $0x8] sm:$0xf]
  %v1364 = vld [vmem:[%s312 + $0xc] sm:$0xf]
  %v1369 = vunpack.c.l.b16 %v1361
  %v1370 = vunpack.c.l.b16 %v1362
  %v1371 = vunpack.c.l.b16 %v1363
  %v1372 = vunpack.c.l.b16 %v1364
  %v1373 = vpack.c.b16 %v1370, %v1369
  %v1374 = vpack.c.b16 %v1372, %v1371
  %1377 = vmatpush.bf16.msra.mxu0 0
  %1378 = vmatpush.bf16.msra.mxu0 0
  %1379 = vmatpush.bf16.msra.mxu0 0
  %1380 = vmatpush.bf16.msra.mxu0 0
  %1381 = vmatpush.bf16.msra.mxu0 0
  %1382 = vmatpush.bf16.msra.mxu0 0
  %1383 = vmatpush.bf16.msra.mxu0 %v1374
  %1384 = vmatpush.bf16.msra.mxu0 %v1373
  %1385 = vmatmul.bf16.gmra.mxu0 %v1346
  %v1386 = vpop.f32.mrf.mxu0
  %v1387 = vadd.f32 0.0, %v1386
  %v1388 = vpop.f32.mrf.mxu0
  %1389 = vdwg.mxu0
  %v1390 = vld [vmem:[%s342] sm:$0xf]
  %v1391 = vld [vmem:[%s342 + $0x4] sm:$0xf]
  %v1392 = vld [vmem:[%s342 + $0x8] sm:$0xf]
  %v1393 = vld [vmem:[%s342 + $0xc] sm:$0xf]
  %v1394 = vld [vmem:[%s5] sm:$0x1]
  %v1396 = vperm.slane %v1394, 0
  %v1402 = vunpack.c.l.b16 %v1390
  %v1403 = vunpack.c.l.b16 %v1391
  %v1404 = vunpack.c.l.b16 %v1392
  %v1405 = vunpack.c.l.b16 %v1393
  %v1406 = vpack.c.b16 %v1403, %v1402
  %v1407 = vpack.c.b16 %v1405, %v1404
  %1410 = vmatpush.bf16.msra.mxu0 0
  %1411 = vmatpush.bf16.msra.mxu0 0
  %1412 = vmatpush.bf16.msra.mxu0 0
  %1413 = vmatpush.bf16.msra.mxu0 0
  %1414 = vmatpush.bf16.msra.mxu0 0
  %1415 = vmatpush.bf16.msra.mxu0 0
  %1416 = vmatpush.bf16.msra.mxu0 %v1407
  %1417 = vmatpush.bf16.msra.mxu0 %v1406
  %1418 = vmatmul.bf16.gmra.mxu0 %v1346
  %v1419 = vpop.f32.mrf.mxu0
  %v1420 = vadd.f32 %v1396, %v1419
  %v1421 = vpop.f32.mrf.mxu0
  %1422 = vdwg.mxu0
  %s1423 = scalar_lea.vmem [#allocation2], 56
  %v1424 = vld [vmem:[%s1423] sm:$0xff]
  %v1425 = vadd.f32 %v1424, %v1358
  %v1426 = vxor.u32 %v1425, 2147483648
  %v1427 = vmul.f32 %v1426, 1.442695
  %v1428 = vpow.pop %v1427
  %v1429 = vadd.f32 %v1428, 1.0
  %v1430 = vrcp.pop %v1429
  %v1431 = vmul.f32 %v1429, %v1430
  %v1432 = vsub.f32 1.0, %v1431
  %v1433 = vmul.f32 %v1430, %v1432
  %v1434 = vadd.f32 %v1430, %v1433
  %vm1435 = vweird.f32 %v1429
  %vm1436 = vweird.f32 %v1430
  %vm1437 = vmor %vm1435, %vm1436
  %v1438 = vsel %vm1437, %v1430, %v1434
  %v1439 = vand.u32 2147483647, %v1429
  %vm1440 = vcmp.eq.f32.partialorder %v1439, 8.507059e+37
  %v1441 = vand.u32 %v1429, 2147483648
  %v1442 = vor.u32 1.1754944e-38, %v1441
  %v1443 = vsel %vm1440, %v1442, %v1438
  %v1444 = vmul.f32 1.0, %v1443
  %s1445 = scalar_lea.vmem [#allocation3], 56
  %v1446 = vld [vmem:[%s1445] sm:$0xff]
  %v1447 = vadd.f32 %v1446, %v1387
  %v1448 = vxor.u32 %v1447, 2147483648
  %v1449 = vmul.f32 %v1448, 1.442695
  %v1450 = vpow.pop %v1449
  %v1451 = vadd.f32 %v1450, 1.0
  %v1452 = vrcp.pop %v1451
  %v1453 = vmul.f32 %v1451, %v1452
  %v1454 = vsub.f32 1.0, %v1453
  %v1455 = vmul.f32 %v1452, %v1454
  %v1456 = vadd.f32 %v1452, %v1455
  %vm1457 = vweird.f32 %v1451
  %vm1458 = vweird.f32 %v1452
  %vm1459 = vmor %vm1457, %vm1458
  %v1460 = vsel %vm1459, %v1452, %v1456
  %v1461 = vand.u32 2147483647, %v1451
  %vm1462 = vcmp.eq.f32.partialorder %v1461, 8.507059e+37
  %v1463 = vand.u32 %v1451, 2147483648
  %v1464 = vor.u32 1.1754944e-38, %v1463
  %v1465 = vsel %vm1462, %v1464, %v1460
  %v1466 = vmul.f32 1.0, %v1465
  %s1467 = scalar_lea.vmem [#allocation4], 56
  %v1468 = vld [vmem:[%s1467] sm:$0xff]
  %v1469 = vmul.f32 %v1444, %v1420
  %v1470 = vadd.f32 %v1468, %v1469
  %v1471 = vtanh.pop %v1470
  %v1472 = vsub.f32 1.0, %v1466
  %v1473 = vmul.f32 %v1472, %v1471
  %v1474 = vmul.f32 %v1466, %v1327
  %v1475 = vadd.f32 %v1473, %v1474
  %1476 = vst.msk [vmem:[#allocation5] sm:$0xff] %vm109, %v1475
  %v1477 = vld [vmem:[#allocation5] sm:$0xff]
  %v1478 = vpack.c.bf16 %v1477, %v1477
  %v1479 = vld [vmem:[%s6] sm:$0xf]
  %v1480 = vld [vmem:[%s6 + $0x4] sm:$0xf]
  %v1481 = vld [vmem:[%s6 + $0x8] sm:$0xf]
  %v1482 = vld [vmem:[%s6 + $0xc] sm:$0xf]
  %v1483 = vld [vmem:[%s7] sm:$0x1]
  %v1485 = vperm.slane %v1483, 0
  %v1491 = vunpack.c.l.b16 %v1479
  %v1492 = vunpack.c.l.b16 %v1480
  %v1493 = vunpack.c.l.b16 %v1481
  %v1494 = vunpack.c.l.b16 %v1482
  %v1495 = vpack.c.b16 %v1492, %v1491
  %v1496 = vpack.c.b16 %v1494, %v1493
  %v1500 = vsel %vm109, %v1478, 0
  %1502 = vmatpush.bf16.msra.mxu0 0
  %1503 = vmatpush.bf16.msra.mxu0 0
  %1504 = vmatpush.bf16.msra.mxu0 0
  %1505 = vmatpush.bf16.msra.mxu0 0
  %1506 = vmatpush.bf16.msra.mxu0 0
  %1507 = vmatpush.bf16.msra.mxu0 0
  %1508 = vmatpush.bf16.msra.mxu0 %v1496
  %1509 = vmatpush.bf16.msra.mxu0 %v1495
  %1510 = vmatmul.bf16.gmra.mxu0 %v1500
  %v1511 = vpop.f32.mrf.mxu0
  %v1512 = vadd.f32 %v1485, %v1511
  %v1513 = vpop.f32.mrf.mxu0
  %1514 = vdwg.mxu0
  %v1515 = vmax.f32 %v1512, 0.0
  %v1516 = vpack.c.bf16 %v1515, %v1515
  %v1517 = vld [vmem:[%s8] sm:$0xf]
  %v1518 = vld [vmem:[%s8 + $0x4] sm:$0xf]
  %v1519 = vld [vmem:[%s8 + $0x8] sm:$0xf]
  %v1520 = vld [vmem:[%s8 + $0xc] sm:$0xf]
  %v1521 = vld [vmem:[%s9] sm:$0x1]
  %v1523 = vperm.slane %v1521, 0
  %v1529 = vunpack.c.l.b16 %v1517
  %v1530 = vunpack.c.l.b16 %v1518
  %v1531 = vunpack.c.l.b16 %v1519
  %v1532 = vunpack.c.l.b16 %v1520
  %v1533 = vpack.c.b16 %v1530, %v1529
  %v1534 = vpack.c.b16 %v1532, %v1531
  %v1538 = vsel %vm109, %v1516, 0
  %1540 = vmatpush.bf16.msra.mxu0 0
  %1541 = vmatpush.bf16.msra.mxu0 0
  %1542 = vmatpush.bf16.msra.mxu0 0
  %1543 = vmatpush.bf16.msra.mxu0 0
  %1544 = vmatpush.bf16.msra.mxu0 0
  %1545 = vmatpush.bf16.msra.mxu0 0
  %1546 = vmatpush.bf16.msra.mxu0 %v1534
  %1547 = vmatpush.bf16.msra.mxu0 %v1533
  %1548 = vmatmul.bf16.gmra.mxu0 %v1538
  %v1549 = vpop.f32.mrf.mxu0
  %v1550 = vadd.f32 %v1523, %v1549
  %v1551 = vpop.f32.mrf.mxu0
  %1552 = vdwg.mxu0
  %v1553 = vmax.f32 %v1550, 0.0
  %v1554 = vld [vmem:[%s10] sm:$0x1]
  %v1556 = vperm.slane %v1554, 0
  %v1558 = vmul.f32 %v1553, %v1556
  %v1559 = vsel %vm109, %v1558, 0.0
  %1560 = vadd.xlane.f32.xlu0 %v1559
  %v1561 = vpop.xlane.xlu0 %1560
  %v1562 = vld [vmem:[#allocation6] sm:$0x1]
  %v1564 = vperm.slane %v1562, 0
  %v1566 = vadd.f32 %v1561, %v1564
  %v1567 = vld [vmem:[%s12] sm:$0xf]
  %v1568 = vld [vmem:[%s12 + $0x4] sm:$0xf]
  %v1569 = vld [vmem:[%s12 + $0x8] sm:$0xf]
  %v1570 = vld [vmem:[%s12 + $0xc] sm:$0xf]
  %v1575 = vunpack.c.l.b16 %v1567
  %v1576 = vunpack.c.l.b16 %v1568
  %v1577 = vunpack.c.l.b16 %v1569
  %v1578 = vunpack.c.l.b16 %v1570
  %v1579 = vpack.c.b16 %v1576, %v1575
  %v1580 = vpack.c.b16 %v1578, %v1577
  %1583 = vmatpush.bf16.msra.mxu0 0
  %1584 = vmatpush.bf16.msra.mxu0 0
  %1585 = vmatpush.bf16.msra.mxu0 0
  %1586 = vmatpush.bf16.msra.mxu0 0
  %1587 = vmatpush.bf16.msra.mxu0 0
  %1588 = vmatpush.bf16.msra.mxu0 0
  %1589 = vmatpush.bf16.msra.mxu0 %v1580
  %1590 = vmatpush.bf16.msra.mxu0 %v1579
  %1591 = vmatmul.bf16.gmra.mxu0 %v1538
  %v1592 = vpop.f32.mrf.mxu0
  %v1593 = vadd.f32 0.0, %v1592
  %v1594 = vpop.f32.mrf.mxu0
  %1595 = vdwg.mxu0
  %v1596 = vld [vmem:[%s1] sm:$0xf]
  %v1597 = vld [vmem:[%s1 + $0x4] sm:$0xf]
  %v1598 = vld [vmem:[%s1 + $0x8] sm:$0xf]
  %v1599 = vld [vmem:[%s1 + $0xc] sm:$0xf]
  %v1600 = vld [vmem:[%s1 + $0x10] sm:$0xf]
  %v1601 = vld [vmem:[%s1 + $0x14] sm:$0xf]
  %v1602 = vld [vmem:[%s1 + $0x18] sm:$0xf]
  %v1603 = vld [vmem:[%s1 + $0x1c] sm:$0xf]
  %v1604 = vld [vmem:[%s13] sm:$0xf]
  %v1605 = vld [vmem:[%s13 + $0x4] sm:$0xf]
  %v1614 = vunpack.c.l.b16 %v1596
  %v1615 = vunpack.c.l.b16 %v1597
  %v1616 = vunpack.c.l.b16 %v1598
  %v1617 = vunpack.c.l.b16 %v1599
  %v1618 = vunpack.c.l.b16 %v1600
  %v1619 = vunpack.c.l.b16 %v1601
  %v1620 = vunpack.c.l.b16 %v1602
  %v1621 = vunpack.c.l.b16 %v1603
  %v1622 = vpack.c.b16 %v1615, %v1614
  %v1623 = vpack.c.b16 %v1617, %v1616
  %v1624 = vpack.c.b16 %v1619, %v1618
  %v1625 = vpack.c.b16 %v1621, %v1620
  %v1628 = vunpack.c.l.b16 %v1604
  %v1629 = vunpack.c.l.b16 %v1605
  %v1630 = vpack.c.b16 %v1629, %v1628
  %vm1632 = vcmask 130048
  %v1634 = vsel %vm1632, %v1622, 0
  %v1637 = vsel %vm1632, %v1623, 0
  %v1640 = vsel %vm1632, %v1624, 0
  %v1643 = vsel %vm1632, %v1625, 0
  %1645 = vmatpush.bf16.msra.mxu0 0
  %1646 = vmatpush.bf16.msra.mxu0 0
  %1647 = vmatpush.bf16.msra.mxu0 0
  %1648 = vmatpush.bf16.msra.mxu0 0
  %1649 = vmatpush.bf16.msra.mxu0 0
  %1650 = vmatpush.bf16.msra.mxu0 0
  %1651 = vmatpush.bf16.msra.mxu0 0
  %1652 = vmatpush.bf16.msra.mxu0 %v1630
  %1653 = vmatmul.bf16.gmra.mxu0 %v1634
  %v1654 = vpop.f32.mrf.mxu0
  %v1655 = vadd.f32 0.0, %v1654
  %v1656 = vpop.f32.mrf.mxu0
  %v1657 = vadd.f32 0.0, %v1656
  %1658 = vmatmul.bf16.gmra.mxu0 %v1637
  %v1659 = vpop.f32.mrf.mxu0
  %v1660 = vadd.f32 0.0, %v1659
  %v1661 = vpop.f32.mrf.mxu0
  %v1662 = vadd.f32 0.0, %v1661
  %1663 = vmatmul.bf16.gmra.mxu0 %v1640
  %v1664 = vpop.f32.mrf.mxu0
  %v1665 = vadd.f32 0.0, %v1664
  %v1666 = vpop.f32.mrf.mxu0
  %v1667 = vadd.f32 0.0, %v1666
  %1668 = vmatmul.bf16.gmra.mxu0 %v1643
  %v1669 = vpop.f32.mrf.mxu0
  %v1670 = vadd.f32 0.0, %v1669
  %v1671 = vpop.f32.mrf.mxu0
  %v1672 = vadd.f32 0.0, %v1671
  %1673 = vdwg.mxu0
  %v1675 = vrot.slane %v1593, 1
  %v1676 = vrot.slane %v1593, 2
  %v1677 = vrot.slane %v1593, 3
  %v1678 = vrot.slane %v1593, 4
  %v1679 = vrot.slane %v1593, 5
  %v1680 = vrot.slane %v1593, 6
  %v1681 = vrot.slane %v1593, 7
  %v1682 = vperm.slane %v1593, 0
  %v1683 = vperm.slane %v1675, 0
  %v1684 = vperm.slane %v1676, 0
  %v1685 = vperm.slane %v1677, 0
  %v1686 = vperm.slane %v1678, 0
  %v1687 = vperm.slane %v1679, 0
  %v1688 = vperm.slane %v1680, 0
  %v1689 = vperm.slane %v1681, 0
  %v1698 = vadd.f32 %v1682, %v1655
  %v1699 = vadd.f32 %v1683, %v1657
  %v1700 = vadd.f32 %v1684, %v1660
  %v1701 = vadd.f32 %v1685, %v1662
  %v1702 = vadd.f32 %v1686, %v1665
  %v1703 = vadd.f32 %v1687, %v1667
  %v1704 = vadd.f32 %v1688, %v1670
  %v1705 = vadd.f32 %v1689, %v1672
  %v1706 = vld [vmem:[%s14] sm:$0x1]
  %v1708 = vperm.slane %v1706, 0
  %v1710 = vadd.f32 %v1698, %v1708
  %v1711 = vadd.f32 %v1699, %v1708
  %v1712 = vadd.f32 %v1700, %v1708
  %v1713 = vadd.f32 %v1701, %v1708
  %v1714 = vadd.f32 %v1702, %v1708
  %v1715 = vadd.f32 %v1703, %v1708
  %v1716 = vadd.f32 %v1704, %v1708
  %v1717 = vadd.f32 %v1705, %v1708
  %v1718 = vmax.f32 %v1710, 0.0
  %v1719 = vmax.f32 %v1711, 0.0
  %v1720 = vmax.f32 %v1712, 0.0
  %v1721 = vmax.f32 %v1713, 0.0
  %v1722 = vmax.f32 %v1714, 0.0
  %v1723 = vmax.f32 %v1715, 0.0
  %v1724 = vmax.f32 %v1716, 0.0
  %v1725 = vmax.f32 %v1717, 0.0
  %v1726 = vld [vmem:[%s15] sm:$0x1]
  %v1728 = vperm.slane %v1726, 0
  %v1730 = vmul.f32 %v1718, %v1728
  %v1731 = vmul.f32 %v1719, %v1728
  %v1732 = vmul.f32 %v1720, %v1728
  %v1733 = vmul.f32 %v1721, %v1728
  %v1734 = vmul.f32 %v1722, %v1728
  %v1735 = vmul.f32 %v1723, %v1728
  %v1736 = vmul.f32 %v1724, %v1728
  %v1737 = vmul.f32 %v1725, %v1728
  %v1738 = vsel %vm109, %v1730, 0.0
  %1739 = vadd.xlane.f32.xlu0 %v1738
  %v1740 = vpop.xlane.xlu0 %1739
  %v1741 = vsel %vm109, %v1731, 0.0
  %1742 = vadd.xlane.f32.xlu0 %v1741
  %v1743 = vpop.xlane.xlu0 %1742
  %v1744 = vsel %vm109, %v1732, 0.0
  %1745 = vadd.xlane.f32.xlu0 %v1744
  %v1746 = vpop.xlane.xlu0 %1745
  %v1747 = vsel %vm109, %v1733, 0.0
  %1748 = vadd.xlane.f32.xlu0 %v1747
  %v1749 = vpop.xlane.xlu0 %1748
  %v1750 = vsel %vm109, %v1734, 0.0
  %1751 = vadd.xlane.f32.xlu0 %v1750
  %v1752 = vpop.xlane.xlu0 %1751
  %v1753 = vsel %vm109, %v1735, 0.0
  %1754 = vadd.xlane.f32.xlu0 %v1753
  %v1755 = vpop.xlane.xlu0 %1754
  %v1756 = vsel %vm109, %v1736, 0.0
  %1757 = vadd.xlane.f32.xlu0 %v1756
  %v1758 = vpop.xlane.xlu0 %1757
  %v1759 = vsel %vm109, %v1737, 0.0
  %1760 = vadd.xlane.f32.xlu0 %v1759
  %v1761 = vpop.xlane.xlu0 %1760
  %v1762 = vld [vmem:[#allocation7] sm:$0x1]
  %v1764 = vperm.slane %v1762, 0
  %1765 = vset.pattern.permute.xlu0 0
  %1766 = vperm.xlu0 %1765, %v1764
  %v1767 = vpop.permute.xlu0 %1766
  %v1769 = vadd.f32 %v1740, %v1767
  %v1770 = vadd.f32 %v1743, %v1767
  %v1771 = vadd.f32 %v1746, %v1767
  %v1772 = vadd.f32 %v1749, %v1767
  %v1773 = vadd.f32 %v1752, %v1767
  %v1774 = vadd.f32 %v1755, %v1767
  %v1775 = vadd.f32 %v1758, %v1767
  %v1776 = vadd.f32 %v1761, %v1767
  %1778 = vset.pattern.permute.xlu0 0
  %1779 = vperm.xlu0 %1778, %v1566
  %v1780 = vpop.permute.xlu0 %1779
  %v1781 = vperm.slane %v1780, 0
  %v1782 = vperm.slane %v1780, 1
  %v1783 = vperm.slane %v1780, 2
  %v1784 = vperm.slane %v1780, 3
  %v1785 = vperm.slane %v1780, 4
  %v1786 = vperm.slane %v1780, 5
  %v1787 = vperm.slane %v1780, 6
  %v1788 = vperm.slane %v1780, 7
  %v1797 = vadd.f32 %v1769, %v1781
  %v1798 = vadd.f32 %v1770, %v1782
  %v1799 = vadd.f32 %v1771, %v1783
  %v1800 = vadd.f32 %v1772, %v1784
  %v1801 = vadd.f32 %v1773, %v1785
  %v1802 = vadd.f32 %v1774, %v1786
  %v1803 = vadd.f32 %v1775, %v1787
  %v1804 = vadd.f32 %v1776, %v1788
  %v1813 = vlaneseq
  %v1814 = vand.u32 %v1813, 127
  %v1815 = vperm.slane %v1769, %v1814
  %v1816 = vperm.slane %v1770, %v1814
  %v1817 = vperm.slane %v1771, %v1814
  %v1818 = vperm.slane %v1772, %v1814
  %v1819 = vperm.slane %v1773, %v1814
  %v1820 = vperm.slane %v1774, %v1814
  %v1821 = vperm.slane %v1775, %v1814
  %v1822 = vperm.slane %v1776, %v1814
  %vm1823 = vcmask 1041409
  %v1824 = vsel %vm1823, %v1816, %v1815
  %vm1825 = vcmask 1042434
  %v1826 = vsel %vm1825, %v1817, %v1824
  %vm1827 = vcmask 1043459
  %v1828 = vsel %vm1827, %v1818, %v1826
  %vm1829 = vcmask 1044484
  %v1830 = vsel %vm1829, %v1819, %v1828
  %vm1831 = vcmask 1045509
  %v1832 = vsel %vm1831, %v1820, %v1830
  %vm1833 = vcmask 1046534
  %v1834 = vsel %vm1833, %v1821, %v1832
  %vm1835 = vcmask 1047559
  %v1836 = vsel %vm1835, %v1822, %v1834
  %vm1838 = vcmask 64512
  %v1839 = vsel %vm1838, %v1836, 0.0
  %1840 = vadd.xlane.f32.xlu0 %v1839
  %v1841 = vpop.xlane.xlu0 %1840
  %v1842 = vrcp.pop 8.0
  %v1843 = vmul.f32 8.0, %v1842
  %v1844 = vsub.f32 1.0, %v1843
  %v1845 = vmul.f32 %v1842, %v1844
  %v1846 = vadd.f32 %v1842, %v1845
  %vm1847 = vweird.f32 %v1842
  %v1848 = vsel %vm1847, %v1842, %v1846
  %v1849 = vmul.f32 %v1841, %v1848
  %v1851 = vperm.slane %v1849, 0
  %v1852 = vperm.slane %v1849, 1
  %v1853 = vperm.slane %v1849, 2
  %v1854 = vperm.slane %v1849, 3
  %v1855 = vperm.slane %v1849, 4
  %v1856 = vperm.slane %v1849, 5
  %v1857 = vperm.slane %v1849, 6
  %v1858 = vperm.slane %v1849, 7
  %v1867 = vsub.f32 %v1797, %v1851
  %v1868 = vsub.f32 %v1798, %v1852
  %v1869 = vsub.f32 %v1799, %v1853
  %v1870 = vsub.f32 %v1800, %v1854
  %v1871 = vsub.f32 %v1801, %v1855
  %v1872 = vsub.f32 %v1802, %v1856
  %v1873 = vsub.f32 %v1803, %v1857
  %v1874 = vsub.f32 %v1804, %v1858
  %1883 = vset.pattern.permute.xlu0 0
  %1884 = vperm.xlu0 %1883, %v1867
  %v1885 = vpop.permute.xlu0 %1884
  %1886 = vset.pattern.permute.xlu0 0
  %1887 = vperm.xlu0 %1886, %v1868
  %v1888 = vpop.permute.xlu0 %1887
  %1889 = vset.pattern.permute.xlu0 0
  %1890 = vperm.xlu0 %1889, %v1869
  %v1891 = vpop.permute.xlu0 %1890
  %1892 = vset.pattern.permute.xlu0 0
  %1893 = vperm.xlu0 %1892, %v1870
  %v1894 = vpop.permute.xlu0 %1893
  %1895 = vset.pattern.permute.xlu0 0
  %1896 = vperm.xlu0 %1895, %v1871
  %v1897 = vpop.permute.xlu0 %1896
  %1898 = vset.pattern.permute.xlu0 0
  %1899 = vperm.xlu0 %1898, %v1872
  %v1900 = vpop.permute.xlu0 %1899
  %1901 = vset.pattern.permute.xlu0 0
  %1902 = vperm.xlu0 %1901, %v1873
  %v1903 = vpop.permute.xlu0 %1902
  %1904 = vset.pattern.permute.xlu0 0
  %1905 = vperm.xlu0 %1904, %v1874
  %v1906 = vpop.permute.xlu0 %1905
  %v1907 = vperm.slane %v1885, %v1814
  %v1908 = vperm.slane %v1888, %v1814
  %v1909 = vperm.slane %v1891, %v1814
  %v1910 = vperm.slane %v1894, %v1814
  %v1911 = vperm.slane %v1897, %v1814
  %v1912 = vperm.slane %v1900, %v1814
  %v1913 = vperm.slane %v1903, %v1814
  %v1914 = vperm.slane %v1906, %v1814
  %v1915 = vsel %vm1823, %v1908, %v1907
  %v1916 = vsel %vm1825, %v1909, %v1915
  %v1917 = vsel %vm1827, %v1910, %v1916
  %v1918 = vsel %vm1829, %v1911, %v1917
  %v1919 = vsel %vm1831, %v1912, %v1918
  %v1920 = vsel %vm1833, %v1913, %v1919
  %v1921 = vsel %vm1835, %v1914, %v1920
  %1923 = vst.msk [vmem:[%s17] sm:$0xff] %vm1838, %v1921
  // Predicated region
  $region70: #{qnet_forward.1} parent=0 // pred_check
    _
  $region71: #{qnet_forward.1} parent=0 // pred_check_branch
    %1925 = sbr.rel (0) target = $region73
  $region72: #{qnet_forward.1} parent=0 // pred_region
    _
  $region73: #{qnet_forward.1} parent=0 // pred_fallthru
    _
  // Predicated region
  $region74: #{qnet_forward.1} parent=0 // pred_check
    _
  $region75: #{qnet_forward.1} parent=0 // pred_check_branch
    %1927 = sbr.rel (0) target = $region77
  $region76: #{qnet_forward.1} parent=0 // pred_region
    _
  $region77: #{qnet_forward.1} parent=0 // pred_fallthru
    _

</llo_original>
